<compile_context>
chip_gen: v7x
topology: tpu7x:2x2x1
jax: 0.10.0
libtpu: 0.0.40
codegen_flags: <defaults>
</compile_context>

<pallas_src>
import functools

import jax
import jax.numpy as jnp
from jax import lax
from jax.experimental import pallas as pl
from jax.experimental.pallas import tpu as pltpu


def _round_up(x, m):
    return (x + m - 1) // m * m


def _choose_chunk_t(T, bp, hp, vp, f, budget_bytes=16 * 1024 * 1024):
    """Largest divisor of T whose chunk-level VMEM footprint fits the budget."""
    best = 1
    for c in range(1, T + 1):
        if T % c != 0:
            continue
        rows = c * bp
        need = 4 * rows * (3 * hp + hp)            # gi + h_all scratch (f32)
        need += 2 * 4 * rows * (f + vp)            # double-buffered x / out blocks
        if need <= budget_bytes:
            best = c
    return best


# ----------------------------------------------------------------------------
# Pallas kernel: one time-chunk of the GRU recurrence (+ chunk-level hoisted
# input projection and output Linear).  PyTorch gate order (r, z, n).
# ----------------------------------------------------------------------------
def gru_forward_kernel(x_ref, wih_ref, whh_ref, ball_ref, bhn_ref, wo_ref,
                       bo_ref, out_ref, h_ref, gi_ref, hall_ref, *,
                       chunk_t, bp):
    # x_ref    : (chunk_t*bp, F)    time-major input rows for this chunk
    # wih_ref  : (F, 3*Hp)          W_ih^T, gate blocks [r | z | n], lane-padded
    # whh_ref  : (Hp, 3*Hp)         W_hh^T, gate blocks lane-padded, rows padded
    # ball_ref : (1, 3*Hp)          b_ih (+ b_hh folded for r/z gates)
    # bhn_ref  : (bp, Hp)           b_hh of the n gate, pre-broadcast over batch
    # wo_ref   : (Hp, Vp)           output_layer.weight^T, zero-padded
    # bo_ref   : (1, Vp)            output_layer.bias, zero-padded
    # out_ref  : (chunk_t*bp, Vp)   logits for this chunk (lane-dense)
    # h_ref    : (bp, Hp)           persistent hidden-state scratch
    # gi_ref   : (chunk_t*bp, 3*Hp) scratch: hoisted input projection
    # hall_ref : (chunk_t*bp, Hp)   scratch: per-step hidden states
    Hp = whh_ref.shape[0]

    @pl.when(pl.program_id(0) == 0)
    def _init():
        h_ref[...] = jnp.zeros_like(h_ref)      # PyTorch default h0 = zeros

    # Hoisted input projection: ONE (chunk_t*bp, F) @ (F, 3*Hp) matmul with the
    # input (and r/z hidden) biases folded in once.  Staged to VMEM scratch so
    # it does not occupy vregs across the recurrence.
    gi_ref[...] = (jnp.dot(x_ref[...], wih_ref[...],
                           preferred_element_type=jnp.float32) + ball_ref[...])

    whh = whh_ref[...]          # (Hp, 3*Hp)  loaded once per chunk
    bhn = bhn_ref[...]          # (bp, Hp)

    def sigmoid(v):             # one EUP op instead of exp + divide
        return 0.5 * jnp.tanh(0.5 * v) + 0.5

    def step(u, h):
        off = pl.multiple_of(u * bp, bp)
        gi_u = gi_ref[pl.ds(off, bp), :]                        # (bp, 3*Hp)
        gh = jnp.dot(h, whh, preferred_element_type=jnp.float32)
        # Gate slices are full-vreg lane-aligned (multiples of Hp = 128).
        r = sigmoid(gi_u[:, 0:Hp] + gh[:, 0:Hp])
        z = sigmoid(gi_u[:, Hp:2 * Hp] + gh[:, Hp:2 * Hp])
        n = jnp.tanh(gi_u[:, 2 * Hp:3 * Hp]
                     + r * (gh[:, 2 * Hp:3 * Hp] + bhn))
        h_new = (1.0 - z) * n + z * h
        hall_ref[pl.ds(off, bp), :] = h_new                     # stage to VMEM
        return h_new

    h_ref[...] = lax.fori_loop(0, chunk_t, step, h_ref[...])

    # Hoisted output projection: ONE (chunk_t*bp, Hp) @ (Hp, Vp) matmul from
    # the h_all scratch and a single unmasked lane-dense store.
    out_ref[...] = (jnp.dot(hall_ref[...], wo_ref[...],
                            preferred_element_type=jnp.float32)
                    + bo_ref[...]).astype(out_ref.dtype)


def gru_pallas(x_tbf, w_ih_t, w_hh_t, b_ih, b_hh, w_out_t, b_out):
    """Runs the GRU + output Linear.  x_tbf: (T, B, F) f32 -> (T, B, V) f32."""
    T, B, F = x_tbf.shape
    H = w_hh_t.shape[0]
    V = w_out_t.shape[1]

    Bp = _round_up(max(B, 8), 8)     # fill the 8 f32 sublanes
    Hp = _round_up(H, 128)           # lane-align each gate block
    Vp = _round_up(V, 128)           # lane-dense output store
    CT = _choose_chunk_t(T, Bp, Hp, Vp, F)   # as big as VMEM allows (T here)

    # Pad batch, flatten time-major to a 2-D (T*Bp, F) slab.
    x2d = jnp.pad(x_tbf, ((0, 0), (0, Bp - B), (0, 0))).reshape(T * Bp, F)

    def pad_gates(w):  # (rows, 3H) -> (rows, 3Hp), each gate starting at k*Hp
        r, z, n = jnp.split(w, 3, axis=-1)
        pad = ((0, 0), (0, Hp - H))
        return jnp.concatenate(
            [jnp.pad(r, pad), jnp.pad(z, pad), jnp.pad(n, pad)], axis=-1)

    wih_p = pad_gates(w_ih_t)                                    # (F, 3Hp)
    whh_p = jnp.pad(pad_gates(w_hh_t), ((0, Hp - H), (0, 0)))    # (Hp, 3Hp)

    bih_r, bih_z, bih_n = jnp.split(b_ih, 3, axis=-1)
    bhh_r, bhh_z, bhh_n = jnp.split(b_hh, 3, axis=-1)
    padb = ((0, 0), (0, Hp - H))
    ball = jnp.concatenate([jnp.pad(bih_r + bhh_r, padb),
                            jnp.pad(bih_z + bhh_z, padb),
                            jnp.pad(bih_n, padb)], axis=-1)      # (1, 3Hp)
    bhn = jnp.broadcast_to(jnp.pad(bhh_n, padb), (Bp, Hp))       # (Bp, Hp)

    wo_p = jnp.pad(w_out_t, ((0, Hp - H), (0, Vp - V)))          # (Hp, Vp)
    bo_p = jnp.pad(b_out, ((0, 0), (0, Vp - V)))                 # (1, Vp)

    rows = CT * Bp
    out2d = pl.pallas_call(
        functools.partial(gru_forward_kernel, chunk_t=CT, bp=Bp),
        out_shape=jax.ShapeDtypeStruct((T * Bp, Vp), jnp.float32),
        grid=(T // CT,),
        in_specs=[
            pl.BlockSpec((rows, F), lambda c: (c, 0)),      # x chunk
            pl.BlockSpec((F, 3 * Hp), lambda c: (0, 0)),    # W_ih
            pl.BlockSpec((Hp, 3 * Hp), lambda c: (0, 0)),   # W_hh
            pl.BlockSpec((1, 3 * Hp), lambda c: (0, 0)),    # folded biases
            pl.BlockSpec((Bp, Hp), lambda c: (0, 0)),       # b_hh (n gate)
            pl.BlockSpec((Hp, Vp), lambda c: (0, 0)),       # W_out
            pl.BlockSpec((1, Vp), lambda c: (0, 0)),        # b_out
        ],
        out_specs=pl.BlockSpec((rows, Vp), lambda c: (c, 0)),
        scratch_shapes=[
            pltpu.VMEM((Bp, Hp), jnp.float32),              # persistent h
            pltpu.VMEM((rows, 3 * Hp), jnp.float32),        # gi staging
            pltpu.VMEM((rows, Hp), jnp.float32),            # h_all staging
        ],
        compiler_params=pltpu.CompilerParams(
            dimension_semantics=("arbitrary",)),             # serial recurrence
    )(x2d, wih_p, whh_p, ball, bhn, wo_p, bo_p)

    return out2d.reshape(T, Bp, Vp)[:, :B, :V]               # strip padding


# ----------------------------------------------------------------------------
# Pure-JAX reference (for correctness check)
# ----------------------------------------------------------------------------
def gru_reference(x_tbf, w_ih_t, w_hh_t, b_ih, b_hh, w_out_t, b_out):
    _, B, _ = x_tbf.shape
    H = w_hh_t.shape[0]

    def step(h, x_t):
        gi = x_t @ w_ih_t + b_ih
        gh = h @ w_hh_t + b_hh
        r = jax.nn.sigmoid(gi[:, 0:H] + gh[:, 0:H])
        z = jax.nn.sigmoid(gi[:, H:2 * H] + gh[:, H:2 * H])
        n = jnp.tanh(gi[:, 2 * H:3 * H] + r * gh[:, 2 * H:3 * H])
        h_new = (1.0 - z) * n + z * h
        return h_new, h_new @ w_out_t + b_out

    h0 = jnp.zeros((B, H), jnp.float32)
    _, outs = lax.scan(step, h0, x_tbf)
    return outs


# ----------------------------------------------------------------------------
# Model wrapper (embedding gathers / concat = glue in plain JAX)
# ----------------------------------------------------------------------------
def init_params(key, vocab_sizes, embedding_dim, hidden_units):
    E, H = embedding_dim, hidden_units
    V1 = vocab_sizes[0]
    ks = jax.random.split(key, 16)
    scale = 0.1
    return {
        "emb_tables": [scale * jax.random.normal(ks[i], (vocab_sizes[i], E),
                                                 jnp.float32)
                       for i in range(6)],
        # cont-feature Linear(1, E): weight stored as row (E,), bias (E,)
        "w7": scale * jax.random.normal(ks[6], (E,), jnp.float32),
        "b7": scale * jax.random.normal(ks[7], (E,), jnp.float32),
        "w8": scale * jax.random.normal(ks[8], (E,), jnp.float32),
        "b8": scale * jax.random.normal(ks[9], (E,), jnp.float32),
        # GRU weights (input_size = E, see TODO above), stored pre-transposed
        "w_ih_t": scale * jax.random.normal(ks[10], (E, 3 * H), jnp.float32),
        "w_hh_t": scale * jax.random.normal(ks[11], (H, 3 * H), jnp.float32),
        "b_ih": scale * jax.random.normal(ks[12], (1, 3 * H), jnp.float32),
        "b_hh": scale * jax.random.normal(ks[13], (1, 3 * H), jnp.float32),
        # output Linear(H, V1), stored pre-transposed
        "w_out_t": scale * jax.random.normal(ks[14], (H, V1), jnp.float32),
        "b_out": scale * jax.random.normal(ks[15], (1, V1), jnp.float32),
    }


def build_sequence(params, input1, input2, input3, input4, input5, input6,
                   inputs7, inputs8):
    """Embeddings + cont-feature linears + dim=1 (sequence) concat."""
    tabs = params["emb_tables"]
    e1 = tabs[0][input1]
    e2 = tabs[1][input2]
    e3 = tabs[2][input3]
    e4 = tabs[3][input4]
    e5 = tabs[4][input5]
    e6 = tabs[5][input6]
    # Linear(1, E) on unsqueezed continuous features: y = x * w + b
    e7 = inputs7[:, :, None] * params["w7"][None, None, :] + params["b7"]
    e8 = inputs8[:, :, None] * params["w8"][None, None, :] + params["b8"]
    return jnp.concatenate([e1, e2, e3, e4, e5, e6, e7, e8], axis=1)  # (B, T, E)


@jax.jit
def gru_model_forward(params, input1, input2, input3, input4, input5, input6,
                      inputs7, inputs8):
    x_bte = build_sequence(params, input1, input2, input3, input4, input5,
                           input6, inputs7, inputs8)          # (B, T, E)
    x_tbe = jnp.transpose(x_bte, (1, 0, 2))                    # (T, B, E)
    out_tbv = gru_pallas(x_tbe, params["w_ih_t"], params["w_hh_t"],
                         params["b_ih"], params["b_hh"],
                         params["w_out_t"], params["b_out"])   # (T, B, V)
    # dropout(0.3) -> identity in eval mode
    return jnp.transpose(out_tbv, (1, 0, 2))                   # (B, T, V)


@jax.jit
def gru_model_forward_ref(params, input1, input2, input3, input4, input5,
                          input6, inputs7, inputs8):
    x_bte = build_sequence(params, input1, input2, input3, input4, input5,
                           input6, inputs7, inputs8)
    x_tbe = jnp.transpose(x_bte, (1, 0, 2))
    out_tbv = gru_reference(x_tbe, params["w_ih_t"], params["w_hh_t"],
                            params["b_ih"], params["b_hh"],
                            params["w_out_t"], params["b_out"])
    return jnp.transpose(out_tbv, (1, 0, 2))


if __name__ == "__main__":
    # Small, deterministic example shapes.
    B, L = 2, 8                       # 8 segments concatenated -> T = 64
    E, H = 8, 32
    vocab_sizes = (11, 12, 13, 14, 15, 16)

    key = jax.random.PRNGKey(0)
    kp, k1, k2, k3, k4, k5, k6, k7, k8 = jax.random.split(key, 9)

    params = init_params(kp, vocab_sizes, E, H)

    input1 = jax.random.randint(k1, (B, L), 0, vocab_sizes[0], jnp.int32)
    input2 = jax.random.randint(k2, (B, L), 0, vocab_sizes[1], jnp.int32)
    input3 = jax.random.randint(k3, (B, L), 0, vocab_sizes[2], jnp.int32)
    input4 = jax.random.randint(k4, (B, L), 0, vocab_sizes[3], jnp.int32)
    input5 = jax.random.randint(k5, (B, L), 0, vocab_sizes[4], jnp.int32)
    input6 = jax.random.randint(k6, (B, L), 0, vocab_sizes[5], jnp.int32)
    inputs7 = jax.random.normal(k7, (B, L), jnp.float32)
    inputs8 = jax.random.normal(k8, (B, L), jnp.float32)

    out = gru_model_forward(params, input1, input2, input3, input4, input5,
                            input6, inputs7, inputs8)
    out = jax.block_until_ready(out)

    ref = gru_model_forward_ref(params, input1, input2, input3, input4,
                                input5, input6, inputs7, inputs8)
    ref = jax.block_until_ready(ref)

    assert out.shape == (B, 8 * L, vocab_sizes[0]), out.shape
    assert bool(jnp.all(jnp.isfinite(out)))
    assert bool(jnp.allclose(out, ref, rtol=5e-3, atol=5e-3)), (
        float(jnp.max(jnp.abs(out - ref))))

    print("KERNEL_OK")
</pallas_src>

<mosaic_0001>
module attributes {stable_mosaic.version = 11 : i64} {
  func.func @gru_forward_kernel(%arg0: i32, %arg1: memref<512x8xf32, #tpu.memory_space<vmem>>, %arg2: memref<8x384xf32, #tpu.memory_space<vmem>>, %arg3: memref<128x384xf32, #tpu.memory_space<vmem>>, %arg4: memref<1x384xf32, #tpu.memory_space<vmem>>, %arg5: memref<8x128xf32, #tpu.memory_space<vmem>>, %arg6: memref<128x128xf32, #tpu.memory_space<vmem>>, %arg7: memref<1x128xf32, #tpu.memory_space<vmem>>, %arg8: memref<512x128xf32, #tpu.memory_space<vmem>>, %arg9: memref<8x128xf32, #tpu.memory_space<vmem>>, %arg10: memref<512x384xf32, #tpu.memory_space<vmem>>, %arg11: memref<512x128xf32, #tpu.memory_space<vmem>>) attributes {dimension_semantics = [#tpu.dimension_semantics<arbitrary>], iteration_bounds = array<i64: 1>, scalar_prefetch = 0 : i64, scratch_operands = 3 : i64, tpu.core_type = #tpu.core_type<tc>, window_params = [{transform_indices = @transform_0, window_bounds = array<i64: 512, 8>}, {pipeline_mode = #tpu.pipeline_mode<synchronous>, transform_indices = @transform_1, window_bounds = array<i64: 8, 384>}, {pipeline_mode = #tpu.pipeline_mode<synchronous>, transform_indices = @transform_2, window_bounds = array<i64: 128, 384>}, {pipeline_mode = #tpu.pipeline_mode<synchronous>, transform_indices = @transform_3, window_bounds = array<i64: 1, 384>}, {pipeline_mode = #tpu.pipeline_mode<synchronous>, transform_indices = @transform_4, window_bounds = array<i64: 8, 128>}, {pipeline_mode = #tpu.pipeline_mode<synchronous>, transform_indices = @transform_5, window_bounds = array<i64: 128, 128>}, {pipeline_mode = #tpu.pipeline_mode<synchronous>, transform_indices = @transform_6, window_bounds = array<i64: 1, 128>}, {transform_indices = @transform_7, window_bounds = array<i64: 512, 128>}]} {
    %c0_i32 = arith.constant 0 : i32
    %0 = arith.cmpi eq, %arg0, %c0_i32 : i32
    %1 = arith.extui %0 : i1 to i32
    %c0_i32_0 = arith.constant 0 : i32
    %2 = arith.cmpi ne, %1, %c0_i32_0 : i32
    scf.if %2 {
      %cst_27 = arith.constant 0.000000e+00 : f32
      %23 = vector.broadcast %cst_27 : f32 to vector<8x128xf32>
      %c0_28 = arith.constant 0 : index
      %c0_29 = arith.constant 0 : index
      %24 = vector.load %arg9[%c0_28, %c0_29] : memref<8x128xf32, #tpu.memory_space<vmem>>, vector<8x128xf32>
      tpu.vector_store %arg9[%c0_28, %c0_29], %23 {strides = array<i32>} : memref<8x128xf32, #tpu.memory_space<vmem>>, vector<8x128xf32>,
    } else {
    }
    %c0 = arith.constant 0 : index
    %c0_1 = arith.constant 0 : index
    %3 = vector.load %arg1[%c0, %c0_1] : memref<512x8xf32, #tpu.memory_space<vmem>>, vector<512x8xf32>
    %c0_2 = arith.constant 0 : index
    %c0_3 = arith.constant 0 : index
    %4 = vector.load %arg2[%c0_2, %c0_3] : memref<8x384xf32, #tpu.memory_space<vmem>>, vector<8x384xf32>
    %cst = arith.constant dense<0.000000e+00> : vector<512x384xf32>
    %5 = tpu.matmul %3, %4, %cst {dimension_numbers = #tpu.dot_dimension_numbers<[1], [0], [0], [1], [0, 0, 1, 1], [], []>} : vector<512x8xf32>, vector<8x384xf32>, vector<512x384xf32> -> vector<512x384xf32>
    %c0_4 = arith.constant 0 : index
    %c0_5 = arith.constant 0 : index
    %6 = vector.load %arg4[%c0_4, %c0_5] : memref<1x384xf32, #tpu.memory_space<vmem>>, vector<1x384xf32>
    %7 = vector.broadcast %6 : vector<1x384xf32> to vector<512x384xf32>
    %8 = arith.addf %5, %7 : vector<512x384xf32>
    %c0_6 = arith.constant 0 : index
    %c0_7 = arith.constant 0 : index
    %9 = vector.load %arg10[%c0_6, %c0_7] : memref<512x384xf32, #tpu.memory_space<vmem>>, vector<512x384xf32>
    tpu.vector_store %arg10[%c0_6, %c0_7], %8 {strides = array<i32>} : memref<512x384xf32, #tpu.memory_space<vmem>>, vector<512x384xf32>,
    %c0_8 = arith.constant 0 : index
    %c0_9 = arith.constant 0 : index
    %10 = vector.load %arg3[%c0_8, %c0_9] : memref<128x384xf32, #tpu.memory_space<vmem>>, vector<128x384xf32>
    %c0_10 = arith.constant 0 : index
    %c0_11 = arith.constant 0 : index
    %11 = vector.load %arg5[%c0_10, %c0_11] : memref<8x128xf32, #tpu.memory_space<vmem>>, vector<8x128xf32>
    %c0_12 = arith.constant 0 : index
    %c0_13 = arith.constant 0 : index
    %12 = vector.load %arg9[%c0_12, %c0_13] : memref<8x128xf32, #tpu.memory_space<vmem>>, vector<8x128xf32>
    %c0_i32_14 = arith.constant 0 : i32
    %c64_i32 = arith.constant 64 : i32
    %13 = arith.addi %c0_i32_14, %c64_i32 : i32
    %c1_i32 = arith.constant 1 : i32
    %14 = scf.for %arg12 = %c0_i32_14 to %13 step %c1_i32 iter_args(%arg13 = %12) -> (vector<8x128xf32>)  : i32 {
      %c8_i32 = arith.constant 8 : i32
      %23 = arith.muli %arg12, %c8_i32 : i32
      %24 = tpu.assume_multiple %23, 8 : i32
      %25 = arith.index_cast %24 : i32 to index
      %c0_27 = arith.constant 0 : index
      %26 = vector.load %arg10[%25, %c0_27] : memref<512x384xf32, #tpu.memory_space<vmem>>, vector<8x384xf32>
      %cst_28 = arith.constant dense<0.000000e+00> : vector<8x384xf32>
      %27 = tpu.matmul %arg13, %10, %cst_28 {dimension_numbers = #tpu.dot_dimension_numbers<[1], [0], [0], [1], [0, 0, 1, 1], [], []>} : vector<8x128xf32>, vector<128x384xf32>, vector<8x384xf32> -> vector<8x384xf32>
      %28 = vector.extract_strided_slice %26 {offsets = [0, 0], sizes = [8, 128], strides = [1, 1]} : vector<8x384xf32> to vector<8x128xf32>
      %29 = vector.extract_strided_slice %27 {offsets = [0, 0], sizes = [8, 128], strides = [1, 1]} : vector<8x384xf32> to vector<8x128xf32>
      %30 = arith.addf %28, %29 : vector<8x128xf32>
      %cst_29 = arith.constant 5.000000e-01 : f32
      %31 = vector.broadcast %cst_29 : f32 to vector<8x128xf32>
      %32 = arith.mulf %31, %30 : vector<8x128xf32>
      %33 = math.tanh %32 : vector<8x128xf32>
      %cst_30 = arith.constant 5.000000e-01 : f32
      %34 = vector.broadcast %cst_30 : f32 to vector<8x128xf32>
      %35 = arith.mulf %34, %33 : vector<8x128xf32>
      %cst_31 = arith.constant 5.000000e-01 : f32
      %36 = vector.broadcast %cst_31 : f32 to vector<8x128xf32>
      %37 = arith.addf %35, %36 : vector<8x128xf32>
      %38 = vector.extract_strided_slice %26 {offsets = [0, 128], sizes = [8, 128], strides = [1, 1]} : vector<8x384xf32> to vector<8x128xf32>
      %39 = vector.extract_strided_slice %27 {offsets = [0, 128], sizes = [8, 128], strides = [1, 1]} : vector<8x384xf32> to vector<8x128xf32>
      %40 = arith.addf %38, %39 : vector<8x128xf32>
      %cst_32 = arith.constant 5.000000e-01 : f32
      %41 = vector.broadcast %cst_32 : f32 to vector<8x128xf32>
      %42 = arith.mulf %41, %40 : vector<8x128xf32>
      %43 = math.tanh %42 : vector<8x128xf32>
      %cst_33 = arith.constant 5.000000e-01 : f32
      %44 = vector.broadcast %cst_33 : f32 to vector<8x128xf32>
      %45 = arith.mulf %44, %43 : vector<8x128xf32>
      %cst_34 = arith.constant 5.000000e-01 : f32
      %46 = vector.broadcast %cst_34 : f32 to vector<8x128xf32>
      %47 = arith.addf %45, %46 : vector<8x128xf32>
      %48 = vector.extract_strided_slice %26 {offsets = [0, 256], sizes = [8, 128], strides = [1, 1]} : vector<8x384xf32> to vector<8x128xf32>
      %49 = vector.extract_strided_slice %27 {offsets = [0, 256], sizes = [8, 128], strides = [1, 1]} : vector<8x384xf32> to vector<8x128xf32>
      %50 = arith.addf %49, %11 : vector<8x128xf32>
      %51 = arith.mulf %37, %50 : vector<8x128xf32>
      %52 = arith.addf %48, %51 : vector<8x128xf32>
      %53 = math.tanh %52 : vector<8x128xf32>
      %cst_35 = arith.constant 1.000000e+00 : f32
      %54 = vector.broadcast %cst_35 : f32 to vector<8x128xf32>
      %55 = arith.subf %54, %47 : vector<8x128xf32>
      %56 = arith.mulf %55, %53 : vector<8x128xf32>
      %57 = arith.mulf %47, %arg13 : vector<8x128xf32>
      %58 = arith.addf %56, %57 : vector<8x128xf32>
      %59 = arith.index_cast %24 : i32 to index
      %c0_36 = arith.constant 0 : index
      %60 = vector.load %arg11[%59, %c0_36] : memref<512x128xf32, #tpu.memory_space<vmem>>, vector<8x128xf32>
      tpu.vector_store %arg11[%59, %c0_36], %58 {strides = array<i32>} : memref<512x128xf32, #tpu.memory_space<vmem>>, vector<8x128xf32>,
      scf.yield %58 : vector<8x128xf32>
    }
    %c64_i32_15 = arith.constant 64 : i32
    %c0_16 = arith.constant 0 : index
    %c0_17 = arith.constant 0 : index
    %15 = vector.load %arg9[%c0_16, %c0_17] : memref<8x128xf32, #tpu.memory_space<vmem>>, vector<8x128xf32>
    tpu.vector_store %arg9[%c0_16, %c0_17], %14 {strides = array<i32>} : memref<8x128xf32, #tpu.memory_space<vmem>>, vector<8x128xf32>,
    %c0_18 = arith.constant 0 : index
    %c0_19 = arith.constant 0 : index
    %16 = vector.load %arg11[%c0_18, %c0_19] : memref<512x128xf32, #tpu.memory_space<vmem>>, vector<512x128xf32>
    %c0_20 = arith.constant 0 : index
    %c0_21 = arith.constant 0 : index
    %17 = vector.load %arg6[%c0_20, %c0_21] : memref<128x128xf32, #tpu.memory_space<vmem>>, vector<128x128xf32>
    %cst_22 = arith.constant dense<0.000000e+00> : vector<512x128xf32>
    %18 = tpu.matmul %16, %17, %cst_22 {dimension_numbers = #tpu.dot_dimension_numbers<[1], [0], [0], [1], [0, 0, 1, 1], [], []>} : vector<512x128xf32>, vector<128x128xf32>, vector<512x128xf32> -> vector<512x128xf32>
    %c0_23 = arith.constant 0 : index
    %c0_24 = arith.constant 0 : index
    %19 = vector.load %arg7[%c0_23, %c0_24] : memref<1x128xf32, #tpu.memory_space<vmem>>, vector<1x128xf32>
    %20 = vector.broadcast %19 : vector<1x128xf32> to vector<512x128xf32>
    %21 = arith.addf %18, %20 : vector<512x128xf32>
    %c0_25 = arith.constant 0 : index
    %c0_26 = arith.constant 0 : index
    %22 = vector.load %arg8[%c0_25, %c0_26] : memref<512x128xf32, #tpu.memory_space<vmem>>, vector<512x128xf32>
    tpu.vector_store %arg8[%c0_25, %c0_26], %21 {strides = array<i32>} : memref<512x128xf32, #tpu.memory_space<vmem>>, vector<512x128xf32>,
    return
  }
  func.func @transform_0(%arg0: i32) -> (i32, i32) {
    %c0_i32 = arith.constant 0 : i32
    %c0_i32_0 = arith.constant 0 : i32
    return %arg0, %c0_i32 : i32, i32
  }
  func.func @transform_1(%arg0: i32) -> (i32, i32) {
    %c0_i32 = arith.constant 0 : i32
    %c0_i32_0 = arith.constant 0 : i32
    %c0_i32_1 = arith.constant 0 : i32
    return %c0_i32, %c0_i32_0 : i32, i32
  }
  func.func @transform_2(%arg0: i32) -> (i32, i32) {
    %c0_i32 = arith.constant 0 : i32
    %c0_i32_0 = arith.constant 0 : i32
    %c0_i32_1 = arith.constant 0 : i32
    return %c0_i32, %c0_i32_0 : i32, i32
  }
  func.func @transform_3(%arg0: i32) -> (i32, i32) {
    %c0_i32 = arith.constant 0 : i32
    %c0_i32_0 = arith.constant 0 : i32
    %c0_i32_1 = arith.constant 0 : i32
    return %c0_i32, %c0_i32_0 : i32, i32
  }
  func.func @transform_4(%arg0: i32) -> (i32, i32) {
    %c0_i32 = arith.constant 0 : i32
    %c0_i32_0 = arith.constant 0 : i32
    %c0_i32_1 = arith.constant 0 : i32
    return %c0_i32, %c0_i32_0 : i32, i32
  }
  func.func @transform_5(%arg0: i32) -> (i32, i32) {
    %c0_i32 = arith.constant 0 : i32
    %c0_i32_0 = arith.constant 0 : i32
    %c0_i32_1 = arith.constant 0 : i32
    return %c0_i32, %c0_i32_0 : i32, i32
  }
  func.func @transform_6(%arg0: i32) -> (i32, i32) {
    %c0_i32 = arith.constant 0 : i32
    %c0_i32_0 = arith.constant 0 : i32
    %c0_i32_1 = arith.constant 0 : i32
    return %c0_i32, %c0_i32_0 : i32, i32
  }
  func.func @transform_7(%arg0: i32) -> (i32, i32) {
    %c0_i32 = arith.constant 0 : i32
    %c0_i32_0 = arith.constant 0 : i32
    return %arg0, %c0_i32 : i32, i32
  }
}

</mosaic_0001>

<llo_original>
// kernel: gru_model_forward.1
$region0: #{gru_model_forward.1}
  #allocation0 [shape = 'u32[]', space=smem, size = 0x4, offset = 0x4, fixed_abs, tag = 'smem constant byte address 0x4 - core index']
  #allocation1 [shape = 'u32[144,128]{1,0:T(1,128)}', space=vmem, size = 0x12000, scoped, tag = 'internal scratch']
  #allocation2 [shape = 'f32[8,128]{1,0:T(8,128)}', space=vmem, size = 0x1000, scoped, tag = 'scratch operand']
  #allocation3 [shape = 'f32[512,384]{1,0:T(8,128)}', space=vmem, size = 0xc0000, scoped, tag = 'scratch operand']
  #allocation4 [shape = 'f32[512,128]{1,0:T(8,128)}', space=vmem, size = 0x40000, scoped, tag = 'scratch operand']
  %s0 = inlined_call_operand.vmem [shape: f32[512,8], index: 0, kind: input, shape index: {}]
  %s1 = inlined_call_operand.vmem [shape: f32[8,384], index: 1, kind: input, shape index: {}]
  %s2 = inlined_call_operand.vmem [shape: f32[128,384], index: 2, kind: input, shape index: {}]
  %s3 = inlined_call_operand.vmem [shape: f32[1,384], index: 3, kind: input, shape index: {}]
  %s4 = inlined_call_operand.vmem [shape: f32[8,128], index: 4, kind: input, shape index: {}]
  %s5 = inlined_call_operand.vmem [shape: f32[128,128], index: 5, kind: input, shape index: {}]
  %s6 = inlined_call_operand.vmem [shape: f32[1,128], index: 6, kind: input, shape index: {}]
  %s7 = inlined_call_operand.vmem [shape: f32[512,128], index: 7, kind: output, shape index: {}]
  %s8 = sld [smem:[#allocation0]]
  $region49: #{gru_model_forward.1} parent=0
    _
  %s10 = ssub.s32 1, %s8
  %s11 = scalar_select 0, %s10, %s8
  // Predicated region
  $region2: #{gru_model_forward.1} parent=0 // pred_check
    _
  $region3: #{gru_model_forward.1} parent=0 // pred_check_branch
    %13 = sbr.rel (0) target = $region5
  $region4: #{gru_model_forward.1} parent=0 // pred_region
    _
  $region5: #{gru_model_forward.1} parent=0 // pred_fallthru
    _
  // Predicated region
  $region6: #{gru_model_forward.1} parent=0 // pred_check
    _
  $region7: #{gru_model_forward.1} parent=0 // pred_check_branch
    %15 = sbr.rel (0) target = $region9
  $region8: #{gru_model_forward.1} parent=0 // pred_region
    _
  $region9: #{gru_model_forward.1} parent=0 // pred_fallthru
    _
  // Predicated region
  $region10: #{gru_model_forward.1} parent=0 // pred_check
    _
  $region11: #{gru_model_forward.1} parent=0 // pred_check_branch
    %17 = sbr.rel (0) target = $region13
  $region12: #{gru_model_forward.1} parent=0 // pred_region
    _
  $region13: #{gru_model_forward.1} parent=0 // pred_fallthru
    _
  // Predicated region
  $region14: #{gru_model_forward.1} parent=0 // pred_check
    _
  $region15: #{gru_model_forward.1} parent=0 // pred_check_branch
    %19 = sbr.rel (0) target = $region17
  $region16: #{gru_model_forward.1} parent=0 // pred_region
    _
  $region17: #{gru_model_forward.1} parent=0 // pred_fallthru
    _
  // Predicated region
  $region18: #{gru_model_forward.1} parent=0 // pred_check
    _
  $region19: #{gru_model_forward.1} parent=0 // pred_check_branch
    %21 = sbr.rel (0) target = $region21
  $region20: #{gru_model_forward.1} parent=0 // pred_region
    _
  $region21: #{gru_model_forward.1} parent=0 // pred_fallthru
    _
  // Predicated region
  $region22: #{gru_model_forward.1} parent=0 // pred_check
    _
  $region23: #{gru_model_forward.1} parent=0 // pred_check_branch
    %23 = sbr.rel (0) target = $region25
  $region24: #{gru_model_forward.1} parent=0 // pred_region
    _
  $region25: #{gru_model_forward.1} parent=0 // pred_fallthru
    _
  // Predicated region
  $region26: #{gru_model_forward.1} parent=0 // pred_check
    _
  $region27: #{gru_model_forward.1} parent=0 // pred_check_branch
    %25 = sbr.rel (0) target = $region29
  $region28: #{gru_model_forward.1} parent=0 // pred_region
    _
  $region29: #{gru_model_forward.1} parent=0 // pred_fallthru
    _
  %p26 = scmp.eq.s32.totalorder 0, 0
  // Predicated region
  $region30: #{gru_model_forward.1} parent=0 // pred_check
    %p27 = pneg %p26
  $region31: #{gru_model_forward.1} parent=0 // pred_check_branch
    %29 = sbr.rel (%p27) target = $region33
  $region32: #{gru_model_forward.1} parent=0 // pred_region
    %30 = vst [vmem:[#allocation2] sm:$0xff] 0.0
  $region33: #{gru_model_forward.1} parent=0 // pred_fallthru
    _
  %v31 = vld [vmem:[%s0] sm:$0xff]
  %v32 = vld [vmem:[%s0 + $0x8] sm:$0xff]
  %v33 = vld [vmem:[%s0 + $0x10] sm:$0xff]
  %v34 = vld [vmem:[%s0 + $0x18] sm:$0xff]
  %v35 = vld [vmem:[%s0 + $0x20] sm:$0xff]
  %v36 = vld [vmem:[%s0 + $0x28] sm:$0xff]
  %v37 = vld [vmem:[%s0 + $0x30] sm:$0xff]
  %v38 = vld [vmem:[%s0 + $0x38] sm:$0xff]
  %v39 = vld [vmem:[%s0 + $0x40] sm:$0xff]
  %v40 = vld [vmem:[%s0 + $0x48] sm:$0xff]
  %v41 = vld [vmem:[%s0 + $0x50] sm:$0xff]
  %v42 = vld [vmem:[%s0 + $0x58] sm:$0xff]
  %v43 = vld [vmem:[%s0 + $0x60] sm:$0xff]
  %v44 = vld [vmem:[%s0 + $0x68] sm:$0xff]
  %v45 = vld [vmem:[%s0 + $0x70] sm:$0xff]
  %v46 = vld [vmem:[%s0 + $0x78] sm:$0xff]
  %v47 = vld [vmem:[%s0 + $0x80] sm:$0xff]
  %v48 = vld [vmem:[%s0 + $0x88] sm:$0xff]
  %v49 = vld [vmem:[%s0 + $0x90] sm:$0xff]
  %v50 = vld [vmem:[%s0 + $0x98] sm:$0xff]
  %v51 = vld [vmem:[%s0 + $0xa0] sm:$0xff]
  %v52 = vld [vmem:[%s0 + $0xa8] sm:$0xff]
  %v53 = vld [vmem:[%s0 + $0xb0] sm:$0xff]
  %v54 = vld [vmem:[%s0 + $0xb8] sm:$0xff]
  %v55 = vld [vmem:[%s0 + $0xc0] sm:$0xff]
  %v56 = vld [vmem:[%s0 + $0xc8] sm:$0xff]
  %v57 = vld [vmem:[%s0 + $0xd0] sm:$0xff]
  %v58 = vld [vmem:[%s0 + $0xd8] sm:$0xff]
  %v59 = vld [vmem:[%s0 + $0xe0] sm:$0xff]
  %v60 = vld [vmem:[%s0 + $0xe8] sm:$0xff]
  %v61 = vld [vmem:[%s0 + $0xf0] sm:$0xff]
  %v62 = vld [vmem:[%s0 + $0xf8] sm:$0xff]
  %v63 = vld [vmem:[%s0 + $0x100] sm:$0xff]
  %v64 = vld [vmem:[%s0 + $0x108] sm:$0xff]
  %v65 = vld [vmem:[%s0 + $0x110] sm:$0xff]
  %v66 = vld [vmem:[%s0 + $0x118] sm:$0xff]
  %v67 = vld [vmem:[%s0 + $0x120] sm:$0xff]
  %v68 = vld [vmem:[%s0 + $0x128] sm:$0xff]
  %v69 = vld [vmem:[%s0 + $0x130] sm:$0xff]
  %v70 = vld [vmem:[%s0 + $0x138] sm:$0xff]
  %v71 = vld [vmem:[%s0 + $0x140] sm:$0xff]
  %v72 = vld [vmem:[%s0 + $0x148] sm:$0xff]
  %v73 = vld [vmem:[%s0 + $0x150] sm:$0xff]
  %v74 = vld [vmem:[%s0 + $0x158] sm:$0xff]
  %v75 = vld [vmem:[%s0 + $0x160] sm:$0xff]
  %v76 = vld [vmem:[%s0 + $0x168] sm:$0xff]
  %v77 = vld [vmem:[%s0 + $0x170] sm:$0xff]
  %v78 = vld [vmem:[%s0 + $0x178] sm:$0xff]
  %v79 = vld [vmem:[%s0 + $0x180] sm:$0xff]
  %v80 = vld [vmem:[%s0 + $0x188] sm:$0xff]
  %v81 = vld [vmem:[%s0 + $0x190] sm:$0xff]
  %v82 = vld [vmem:[%s0 + $0x198] sm:$0xff]
  %v83 = vld [vmem:[%s0 + $0x1a0] sm:$0xff]
  %v84 = vld [vmem:[%s0 + $0x1a8] sm:$0xff]
  %v85 = vld [vmem:[%s0 + $0x1b0] sm:$0xff]
  %v86 = vld [vmem:[%s0 + $0x1b8] sm:$0xff]
  %v87 = vld [vmem:[%s0 + $0x1c0] sm:$0xff]
  %v88 = vld [vmem:[%s0 + $0x1c8] sm:$0xff]
  %v89 = vld [vmem:[%s0 + $0x1d0] sm:$0xff]
  %v90 = vld [vmem:[%s0 + $0x1d8] sm:$0xff]
  %v91 = vld [vmem:[%s0 + $0x1e0] sm:$0xff]
  %v92 = vld [vmem:[%s0 + $0x1e8] sm:$0xff]
  %v93 = vld [vmem:[%s0 + $0x1f0] sm:$0xff]
  %v94 = vld [vmem:[%s0 + $0x1f8] sm:$0xff]
  %v95 = vld [vmem:[%s1] sm:$0xff]
  %v96 = vld [vmem:[%s1 + $0x8] sm:$0xff]
  %v97 = vld [vmem:[%s1 + $0x10] sm:$0xff]
  %v98 = vld [vmem:[%s3] sm:$0x7]
  %v100 = vlaneseq
  %v101 = vshrl.u32 %v100, 7
  %v102 = vsub.s32 0, %v101
  %v103 = vrot.slane %v98, %v102
  %v104 = vlaneseq
  %v105 = vshrl.u32 %v104, 7
  %v106 = vsub.s32 1, %v105
  %v107 = vrot.slane %v98, %v106
  %v108 = vlaneseq
  %v109 = vshrl.u32 %v108, 7
  %v110 = vsub.s32 2, %v109
  %v111 = vrot.slane %v98, %v110
  %vm115 = vcmask 64512
  %v117 = vsel %vm115, %v31, 0
  %v120 = vsel %vm115, %v32, 0
  %v123 = vsel %vm115, %v33, 0
  %v126 = vsel %vm115, %v34, 0
  %v129 = vsel %vm115, %v35, 0
  %v132 = vsel %vm115, %v36, 0
  %v135 = vsel %vm115, %v37, 0
  %v138 = vsel %vm115, %v38, 0
  %v141 = vsel %vm115, %v39, 0
  %v144 = vsel %vm115, %v40, 0
  %v147 = vsel %vm115, %v41, 0
  %v150 = vsel %vm115, %v42, 0
  %v153 = vsel %vm115, %v43, 0
  %v156 = vsel %vm115, %v44, 0
  %v159 = vsel %vm115, %v45, 0
  %v162 = vsel %vm115, %v46, 0
  %v165 = vsel %vm115, %v47, 0
  %v168 = vsel %vm115, %v48, 0
  %v171 = vsel %vm115, %v49, 0
  %v174 = vsel %vm115, %v50, 0
  %v177 = vsel %vm115, %v51, 0
  %v180 = vsel %vm115, %v52, 0
  %v183 = vsel %vm115, %v53, 0
  %v186 = vsel %vm115, %v54, 0
  %v189 = vsel %vm115, %v55, 0
  %v192 = vsel %vm115, %v56, 0
  %v195 = vsel %vm115, %v57, 0
  %v198 = vsel %vm115, %v58, 0
  %v201 = vsel %vm115, %v59, 0
  %v204 = vsel %vm115, %v60, 0
  %v207 = vsel %vm115, %v61, 0
  %v210 = vsel %vm115, %v62, 0
  %v213 = vsel %vm115, %v63, 0
  %v216 = vsel %vm115, %v64, 0
  %v219 = vsel %vm115, %v65, 0
  %v222 = vsel %vm115, %v66, 0
  %v225 = vsel %vm115, %v67, 0
  %v228 = vsel %vm115, %v68, 0
  %v231 = vsel %vm115, %v69, 0
  %v234 = vsel %vm115, %v70, 0
  %v237 = vsel %vm115, %v71, 0
  %v240 = vsel %vm115, %v72, 0
  %v243 = vsel %vm115, %v73, 0
  %v246 = vsel %vm115, %v74, 0
  %v249 = vsel %vm115, %v75, 0
  %v252 = vsel %vm115, %v76, 0
  %v255 = vsel %vm115, %v77, 0
  %v258 = vsel %vm115, %v78, 0
  %v261 = vsel %vm115, %v79, 0
  %v264 = vsel %vm115, %v80, 0
  %v267 = vsel %vm115, %v81, 0
  %v270 = vsel %vm115, %v82, 0
  %v273 = vsel %vm115, %v83, 0
  %v276 = vsel %vm115, %v84, 0
  %v279 = vsel %vm115, %v85, 0
  %v282 = vsel %vm115, %v86, 0
  %v285 = vsel %vm115, %v87, 0
  %v288 = vsel %vm115, %v88, 0
  %v291 = vsel %vm115, %v89, 0
  %v294 = vsel %vm115, %v90, 0
  %v297 = vsel %vm115, %v91, 0
  %v300 = vsel %vm115, %v92, 0
  %v303 = vsel %vm115, %v93, 0
  %v306 = vsel %vm115, %v94, 0
  %308 = vmatprep.subr.mxu0 %v96
  %309 = vmatpush1.msra.mxu0 %v95
  %310 = vmatprep.subr.mxu0 0.0
  %311 = vmatpush1.msra.mxu0 0.0
  %312 = vmatprep.subr.mxu0 0.0
  %313 = vmatpush1.msra.mxu0 0.0
  %314 = vmatprep.subr.mxu0 0.0
  %315 = vmatpush1.msra.mxu0 0.0
  %316 = vmatprep.subr.mxu0 0.0
  %317 = vmatpush1.msra.mxu0 0.0
  %318 = vmatprep.subr.mxu0 0.0
  %319 = vmatpush1.msra.mxu0 0.0
  %320 = vmatprep.subr.mxu0 0.0
  %321 = vmatpush1.msra.mxu0 0.0
  %322 = vmatprep.subr.mxu0 0.0
  %323 = vmatpush1.msra.mxu0 0.0
  %324 = vmatprep.subr.mxu0 0.0
  %325 = vmatpush1.msra.mxu0 0.0
  %326 = vmatprep.subr.mxu0 0.0
  %327 = vmatpush1.msra.mxu0 0.0
  %328 = vmatprep.subr.mxu0 0.0
  %329 = vmatpush1.msra.mxu0 0.0
  %330 = vmatprep.subr.mxu0 0.0
  %331 = vmatpush1.msra.mxu0 0.0
  %332 = vmatprep.subr.mxu0 0.0
  %333 = vmatpush1.msra.mxu0 0.0
  %334 = vmatprep.subr.mxu0 0.0
  %335 = vmatpush1.msra.mxu0 0.0
  %336 = vmatprep.subr.mxu0 0.0
  %337 = vmatpush1.msra.mxu0 0.0
  %338 = vmatprep.subr.mxu0 0.0
  %339 = vmatpush1.msra.mxu0 0.0
  %340 = vmatprep.subr.mxu0 0.0
  %341 = vmatpush1.msra.mxu0 0.0
  %342 = vmatprep.subr.mxu0 0.0
  %343 = vmatpush1.msra.mxu0 0.0
  %344 = vmatprep.subr.mxu0 0.0
  %345 = vmatpush1.msra.mxu0 0.0
  %346 = vmatprep.subr.mxu0 0.0
  %347 = vmatpush1.msra.mxu0 0.0
  %348 = vmatprep.subr.mxu0 0.0
  %349 = vmatpush1.msra.mxu0 0.0
  %350 = vmatprep.subr.mxu0 0.0
  %351 = vmatpush1.msra.mxu0 0.0
  %352 = vmatprep.subr.mxu0 0.0
  %353 = vmatpush1.msra.mxu0 0.0
  %354 = vmatprep.subr.mxu0 0.0
  %355 = vmatpush1.msra.mxu0 0.0
  %356 = vmatprep.subr.mxu0 0.0
  %357 = vmatpush1.msra.mxu0 0.0
  %358 = vmatprep.subr.mxu0 0.0
  %359 = vmatpush1.msra.mxu0 0.0
  %360 = vmatprep.subr.mxu0 0.0
  %361 = vmatpush1.msra.mxu0 0.0
  %362 = vmatprep.subr.mxu0 0.0
  %363 = vmatpush1.msra.mxu0 0.0
  %364 = vmatprep.subr.mxu0 0.0
  %365 = vmatpush1.msra.mxu0 0.0
  %366 = vmatprep.subr.mxu0 0.0
  %367 = vmatpush1.msra.mxu0 0.0
  %368 = vmatprep.subr.mxu0 0.0
  %369 = vmatpush1.msra.mxu0 0.0
  %370 = vmatprep.subr.mxu0 0.0
  %371 = vmatpush1.msra.mxu0 0.0
  %372 = vmatprep.mubr.f32.mxu0 0.0
  %373 = vmatmul.mubr.f32.gmra.mrb[0].mxu0 %v117
  %v374 = vpop.f32.mrb[0].mxu0
  %v375 = vadd.f32 %v103, %v374
  %v376 = vpop.f32.mrb[0].mxu0
  %v377 = vadd.f32 %v107, %v376
  %378 = vmatprep.mubr.f32.mxu0 0.0
  %379 = vmatmul.mubr.f32.gmra.mrb[0].mxu0 %v120
  %v380 = vpop.f32.mrb[0].mxu0
  %v381 = vadd.f32 %v103, %v380
  %v382 = vpop.f32.mrb[0].mxu0
  %v383 = vadd.f32 %v107, %v382
  %384 = vmatprep.mubr.f32.mxu0 0.0
  %385 = vmatmul.mubr.f32.gmra.mrb[0].mxu0 %v123
  %v386 = vpop.f32.mrb[0].mxu0
  %v387 = vadd.f32 %v103, %v386
  %v388 = vpop.f32.mrb[0].mxu0
  %v389 = vadd.f32 %v107, %v388
  %390 = vmatprep.mubr.f32.mxu0 0.0
  %391 = vmatmul.mubr.f32.gmra.mrb[0].mxu0 %v126
  %v392 = vpop.f32.mrb[0].mxu0
  %v393 = vadd.f32 %v103, %v392
  %v394 = vpop.f32.mrb[0].mxu0
  %v395 = vadd.f32 %v107, %v394
  %396 = vmatprep.mubr.f32.mxu0 0.0
  %397 = vmatmul.mubr.f32.gmra.mrb[0].mxu0 %v129
  %v398 = vpop.f32.mrb[0].mxu0
  %v399 = vadd.f32 %v103, %v398
  %v400 = vpop.f32.mrb[0].mxu0
  %v401 = vadd.f32 %v107, %v400
  %402 = vmatprep.mubr.f32.mxu0 0.0
  %403 = vmatmul.mubr.f32.gmra.mrb[0].mxu0 %v132
  %v404 = vpop.f32.mrb[0].mxu0
  %v405 = vadd.f32 %v103, %v404
  %v406 = vpop.f32.mrb[0].mxu0
  %v407 = vadd.f32 %v107, %v406
  %408 = vmatprep.mubr.f32.mxu0 0.0
  %409 = vmatmul.mubr.f32.gmra.mrb[0].mxu0 %v135
  %v410 = vpop.f32.mrb[0].mxu0
  %v411 = vadd.f32 %v103, %v410
  %v412 = vpop.f32.mrb[0].mxu0
  %v413 = vadd.f32 %v107, %v412
  %414 = vmatprep.mubr.f32.mxu0 0.0
  %415 = vmatmul.mubr.f32.gmra.mrb[0].mxu0 %v138
  %v416 = vpop.f32.mrb[0].mxu0
  %v417 = vadd.f32 %v103, %v416
  %v418 = vpop.f32.mrb[0].mxu0
  %v419 = vadd.f32 %v107, %v418
  %420 = vmatprep.mubr.f32.mxu0 0.0
  %421 = vmatmul.mubr.f32.gmra.mrb[0].mxu0 %v141
  %v422 = vpop.f32.mrb[0].mxu0
  %v423 = vadd.f32 %v103, %v422
  %v424 = vpop.f32.mrb[0].mxu0
  %v425 = vadd.f32 %v107, %v424
  %426 = vmatprep.mubr.f32.mxu0 0.0
  %427 = vmatmul.mubr.f32.gmra.mrb[0].mxu0 %v144
  %v428 = vpop.f32.mrb[0].mxu0
  %v429 = vadd.f32 %v103, %v428
  %v430 = vpop.f32.mrb[0].mxu0
  %v431 = vadd.f32 %v107, %v430
  %432 = vmatprep.mubr.f32.mxu0 0.0
  %433 = vmatmul.mubr.f32.gmra.mrb[0].mxu0 %v147
  %v434 = vpop.f32.mrb[0].mxu0
  %v435 = vadd.f32 %v103, %v434
  %v436 = vpop.f32.mrb[0].mxu0
  %v437 = vadd.f32 %v107, %v436
  %438 = vmatprep.mubr.f32.mxu0 0.0
  %439 = vmatmul.mubr.f32.gmra.mrb[0].mxu0 %v150
  %v440 = vpop.f32.mrb[0].mxu0
  %v441 = vadd.f32 %v103, %v440
  %v442 = vpop.f32.mrb[0].mxu0
  %v443 = vadd.f32 %v107, %v442
  %444 = vmatprep.mubr.f32.mxu0 0.0
  %445 = vmatmul.mubr.f32.gmra.mrb[0].mxu0 %v153
  %v446 = vpop.f32.mrb[0].mxu0
  %v447 = vadd.f32 %v103, %v446
  %v448 = vpop.f32.mrb[0].mxu0
  %v449 = vadd.f32 %v107, %v448
  %450 = vmatprep.mubr.f32.mxu0 0.0
  %451 = vmatmul.mubr.f32.gmra.mrb[0].mxu0 %v156
  %v452 = vpop.f32.mrb[0].mxu0
  %v453 = vadd.f32 %v103, %v452
  %v454 = vpop.f32.mrb[0].mxu0
  %v455 = vadd.f32 %v107, %v454
  %456 = vmatprep.mubr.f32.mxu0 0.0
  %457 = vmatmul.mubr.f32.gmra.mrb[0].mxu0 %v159
  %v458 = vpop.f32.mrb[0].mxu0
  %v459 = vadd.f32 %v103, %v458
  %v460 = vpop.f32.mrb[0].mxu0
  %v461 = vadd.f32 %v107, %v460
  %462 = vmatprep.mubr.f32.mxu0 0.0
  %463 = vmatmul.mubr.f32.gmra.mrb[0].mxu0 %v162
  %v464 = vpop.f32.mrb[0].mxu0
  %v465 = vadd.f32 %v103, %v464
  %v466 = vpop.f32.mrb[0].mxu0
  %v467 = vadd.f32 %v107, %v466
  %468 = vmatprep.mubr.f32.mxu0 0.0
  %469 = vmatmul.mubr.f32.gmra.mrb[0].mxu0 %v165
  %v470 = vpop.f32.mrb[0].mxu0
  %v471 = vadd.f32 %v103, %v470
  %v472 = vpop.f32.mrb[0].mxu0
  %v473 = vadd.f32 %v107, %v472
  %474 = vmatprep.mubr.f32.mxu0 0.0
  %475 = vmatmul.mubr.f32.gmra.mrb[0].mxu0 %v168
  %v476 = vpop.f32.mrb[0].mxu0
  %v477 = vadd.f32 %v103, %v476
  %v478 = vpop.f32.mrb[0].mxu0
  %v479 = vadd.f32 %v107, %v478
  %480 = vmatprep.mubr.f32.mxu0 0.0
  %481 = vmatmul.mubr.f32.gmra.mrb[0].mxu0 %v171
  %v482 = vpop.f32.mrb[0].mxu0
  %v483 = vadd.f32 %v103, %v482
  %v484 = vpop.f32.mrb[0].mxu0
  %v485 = vadd.f32 %v107, %v484
  %486 = vmatprep.mubr.f32.mxu0 0.0
  %487 = vmatmul.mubr.f32.gmra.mrb[0].mxu0 %v174
  %v488 = vpop.f32.mrb[0].mxu0
  %v489 = vadd.f32 %v103, %v488
  %v490 = vpop.f32.mrb[0].mxu0
  %v491 = vadd.f32 %v107, %v490
  %492 = vmatprep.mubr.f32.mxu0 0.0
  %493 = vmatmul.mubr.f32.gmra.mrb[0].mxu0 %v177
  %v494 = vpop.f32.mrb[0].mxu0
  %v495 = vadd.f32 %v103, %v494
  %v496 = vpop.f32.mrb[0].mxu0
  %v497 = vadd.f32 %v107, %v496
  %498 = vmatprep.mubr.f32.mxu0 0.0
  %499 = vmatmul.mubr.f32.gmra.mrb[0].mxu0 %v180
  %v500 = vpop.f32.mrb[0].mxu0
  %v501 = vadd.f32 %v103, %v500
  %v502 = vpop.f32.mrb[0].mxu0
  %v503 = vadd.f32 %v107, %v502
  %504 = vmatprep.mubr.f32.mxu0 0.0
  %505 = vmatmul.mubr.f32.gmra.mrb[0].mxu0 %v183
  %v506 = vpop.f32.mrb[0].mxu0
  %v507 = vadd.f32 %v103, %v506
  %v508 = vpop.f32.mrb[0].mxu0
  %v509 = vadd.f32 %v107, %v508
  %510 = vmatprep.mubr.f32.mxu0 0.0
  %511 = vmatmul.mubr.f32.gmra.mrb[0].mxu0 %v186
  %v512 = vpop.f32.mrb[0].mxu0
  %v513 = vadd.f32 %v103, %v512
  %v514 = vpop.f32.mrb[0].mxu0
  %v515 = vadd.f32 %v107, %v514
  %516 = vmatprep.mubr.f32.mxu0 0.0
  %517 = vmatmul.mubr.f32.gmra.mrb[0].mxu0 %v189
  %v518 = vpop.f32.mrb[0].mxu0
  %v519 = vadd.f32 %v103, %v518
  %v520 = vpop.f32.mrb[0].mxu0
  %v521 = vadd.f32 %v107, %v520
  %522 = vmatprep.mubr.f32.mxu0 0.0
  %523 = vmatmul.mubr.f32.gmra.mrb[0].mxu0 %v192
  %v524 = vpop.f32.mrb[0].mxu0
  %v525 = vadd.f32 %v103, %v524
  %v526 = vpop.f32.mrb[0].mxu0
  %v527 = vadd.f32 %v107, %v526
  %528 = vmatprep.mubr.f32.mxu0 0.0
  %529 = vmatmul.mubr.f32.gmra.mrb[0].mxu0 %v195
  %v530 = vpop.f32.mrb[0].mxu0
  %v531 = vadd.f32 %v103, %v530
  %v532 = vpop.f32.mrb[0].mxu0
  %v533 = vadd.f32 %v107, %v532
  %534 = vmatprep.mubr.f32.mxu0 0.0
  %535 = vmatmul.mubr.f32.gmra.mrb[0].mxu0 %v198
  %v536 = vpop.f32.mrb[0].mxu0
  %v537 = vadd.f32 %v103, %v536
  %v538 = vpop.f32.mrb[0].mxu0
  %v539 = vadd.f32 %v107, %v538
  %540 = vmatprep.mubr.f32.mxu0 0.0
  %541 = vmatmul.mubr.f32.gmra.mrb[0].mxu0 %v201
  %v542 = vpop.f32.mrb[0].mxu0
  %v543 = vadd.f32 %v103, %v542
  %v544 = vpop.f32.mrb[0].mxu0
  %v545 = vadd.f32 %v107, %v544
  %546 = vmatprep.mubr.f32.mxu0 0.0
  %547 = vmatmul.mubr.f32.gmra.mrb[0].mxu0 %v204
  %v548 = vpop.f32.mrb[0].mxu0
  %v549 = vadd.f32 %v103, %v548
  %v550 = vpop.f32.mrb[0].mxu0
  %v551 = vadd.f32 %v107, %v550
  %552 = vmatprep.mubr.f32.mxu0 0.0
  %553 = vmatmul.mubr.f32.gmra.mrb[0].mxu0 %v207
  %v554 = vpop.f32.mrb[0].mxu0
  %v555 = vadd.f32 %v103, %v554
  %v556 = vpop.f32.mrb[0].mxu0
  %v557 = vadd.f32 %v107, %v556
  %558 = vmatprep.mubr.f32.mxu0 0.0
  %559 = vmatmul.mubr.f32.gmra.mrb[0].mxu0 %v210
  %v560 = vpop.f32.mrb[0].mxu0
  %v561 = vadd.f32 %v103, %v560
  %v562 = vpop.f32.mrb[0].mxu0
  %v563 = vadd.f32 %v107, %v562
  %564 = vmatprep.mubr.f32.mxu0 0.0
  %565 = vmatmul.mubr.f32.gmra.mrb[0].mxu0 %v213
  %v566 = vpop.f32.mrb[0].mxu0
  %v567 = vadd.f32 %v103, %v566
  %v568 = vpop.f32.mrb[0].mxu0
  %v569 = vadd.f32 %v107, %v568
  %570 = vmatprep.mubr.f32.mxu0 0.0
  %571 = vmatmul.mubr.f32.gmra.mrb[0].mxu0 %v216
  %v572 = vpop.f32.mrb[0].mxu0
  %v573 = vadd.f32 %v103, %v572
  %v574 = vpop.f32.mrb[0].mxu0
  %v575 = vadd.f32 %v107, %v574
  %576 = vmatprep.mubr.f32.mxu0 0.0
  %577 = vmatmul.mubr.f32.gmra.mrb[0].mxu0 %v219
  %v578 = vpop.f32.mrb[0].mxu0
  %v579 = vadd.f32 %v103, %v578
  %v580 = vpop.f32.mrb[0].mxu0
  %v581 = vadd.f32 %v107, %v580
  %582 = vmatprep.mubr.f32.mxu0 0.0
  %583 = vmatmul.mubr.f32.gmra.mrb[0].mxu0 %v222
  %v584 = vpop.f32.mrb[0].mxu0
  %v585 = vadd.f32 %v103, %v584
  %v586 = vpop.f32.mrb[0].mxu0
  %v587 = vadd.f32 %v107, %v586
  %588 = vmatprep.mubr.f32.mxu0 0.0
  %589 = vmatmul.mubr.f32.gmra.mrb[0].mxu0 %v225
  %v590 = vpop.f32.mrb[0].mxu0
  %v591 = vadd.f32 %v103, %v590
  %v592 = vpop.f32.mrb[0].mxu0
  %v593 = vadd.f32 %v107, %v592
  %594 = vmatprep.mubr.f32.mxu0 0.0
  %595 = vmatmul.mubr.f32.gmra.mrb[0].mxu0 %v228
  %v596 = vpop.f32.mrb[0].mxu0
  %v597 = vadd.f32 %v103, %v596
  %v598 = vpop.f32.mrb[0].mxu0
  %v599 = vadd.f32 %v107, %v598
  %600 = vmatprep.mubr.f32.mxu0 0.0
  %601 = vmatmul.mubr.f32.gmra.mrb[0].mxu0 %v231
  %v602 = vpop.f32.mrb[0].mxu0
  %v603 = vadd.f32 %v103, %v602
  %v604 = vpop.f32.mrb[0].mxu0
  %v605 = vadd.f32 %v107, %v604
  %606 = vmatprep.mubr.f32.mxu0 0.0
  %607 = vmatmul.mubr.f32.gmra.mrb[0].mxu0 %v234
  %v608 = vpop.f32.mrb[0].mxu0
  %v609 = vadd.f32 %v103, %v608
  %v610 = vpop.f32.mrb[0].mxu0
  %v611 = vadd.f32 %v107, %v610
  %612 = vmatprep.mubr.f32.mxu0 0.0
  %613 = vmatmul.mubr.f32.gmra.mrb[0].mxu0 %v237
  %v614 = vpop.f32.mrb[0].mxu0
  %v615 = vadd.f32 %v103, %v614
  %v616 = vpop.f32.mrb[0].mxu0
  %v617 = vadd.f32 %v107, %v616
  %618 = vmatprep.mubr.f32.mxu0 0.0
  %619 = vmatmul.mubr.f32.gmra.mrb[0].mxu0 %v240
  %v620 = vpop.f32.mrb[0].mxu0
  %v621 = vadd.f32 %v103, %v620
  %v622 = vpop.f32.mrb[0].mxu0
  %v623 = vadd.f32 %v107, %v622
  %624 = vmatprep.mubr.f32.mxu0 0.0
  %625 = vmatmul.mubr.f32.gmra.mrb[0].mxu0 %v243
  %v626 = vpop.f32.mrb[0].mxu0
  %v627 = vadd.f32 %v103, %v626
  %v628 = vpop.f32.mrb[0].mxu0
  %v629 = vadd.f32 %v107, %v628
  %630 = vmatprep.mubr.f32.mxu0 0.0
  %631 = vmatmul.mubr.f32.gmra.mrb[0].mxu0 %v246
  %v632 = vpop.f32.mrb[0].mxu0
  %v633 = vadd.f32 %v103, %v632
  %v634 = vpop.f32.mrb[0].mxu0
  %v635 = vadd.f32 %v107, %v634
  %636 = vmatprep.mubr.f32.mxu0 0.0
  %637 = vmatmul.mubr.f32.gmra.mrb[0].mxu0 %v249
  %v638 = vpop.f32.mrb[0].mxu0
  %v639 = vadd.f32 %v103, %v638
  %v640 = vpop.f32.mrb[0].mxu0
  %v641 = vadd.f32 %v107, %v640
  %642 = vmatprep.mubr.f32.mxu0 0.0
  %643 = vmatmul.mubr.f32.gmra.mrb[0].mxu0 %v252
  %v644 = vpop.f32.mrb[0].mxu0
  %v645 = vadd.f32 %v103, %v644
  %v646 = vpop.f32.mrb[0].mxu0
  %v647 = vadd.f32 %v107, %v646
  %648 = vmatprep.mubr.f32.mxu0 0.0
  %649 = vmatmul.mubr.f32.gmra.mrb[0].mxu0 %v255
  %v650 = vpop.f32.mrb[0].mxu0
  %v651 = vadd.f32 %v103, %v650
  %v652 = vpop.f32.mrb[0].mxu0
  %v653 = vadd.f32 %v107, %v652
  %654 = vmatprep.mubr.f32.mxu0 0.0
  %655 = vmatmul.mubr.f32.gmra.mrb[0].mxu0 %v258
  %v656 = vpop.f32.mrb[0].mxu0
  %v657 = vadd.f32 %v103, %v656
  %v658 = vpop.f32.mrb[0].mxu0
  %v659 = vadd.f32 %v107, %v658
  %660 = vmatprep.mubr.f32.mxu0 0.0
  %661 = vmatmul.mubr.f32.gmra.mrb[0].mxu0 %v261
  %v662 = vpop.f32.mrb[0].mxu0
  %v663 = vadd.f32 %v103, %v662
  %v664 = vpop.f32.mrb[0].mxu0
  %v665 = vadd.f32 %v107, %v664
  %666 = vmatprep.mubr.f32.mxu0 0.0
  %667 = vmatmul.mubr.f32.gmra.mrb[0].mxu0 %v264
  %v668 = vpop.f32.mrb[0].mxu0
  %v669 = vadd.f32 %v103, %v668
  %v670 = vpop.f32.mrb[0].mxu0
  %v671 = vadd.f32 %v107, %v670
  %672 = vmatprep.mubr.f32.mxu0 0.0
  %673 = vmatmul.mubr.f32.gmra.mrb[0].mxu0 %v267
  %v674 = vpop.f32.mrb[0].mxu0
  %v675 = vadd.f32 %v103, %v674
  %v676 = vpop.f32.mrb[0].mxu0
  %v677 = vadd.f32 %v107, %v676
  %678 = vmatprep.mubr.f32.mxu0 0.0
  %679 = vmatmul.mubr.f32.gmra.mrb[0].mxu0 %v270
  %v680 = vpop.f32.mrb[0].mxu0
  %v681 = vadd.f32 %v103, %v680
  %v682 = vpop.f32.mrb[0].mxu0
  %v683 = vadd.f32 %v107, %v682
  %684 = vmatprep.mubr.f32.mxu0 0.0
  %685 = vmatmul.mubr.f32.gmra.mrb[0].mxu0 %v273
  %v686 = vpop.f32.mrb[0].mxu0
  %v687 = vadd.f32 %v103, %v686
  %v688 = vpop.f32.mrb[0].mxu0
  %v689 = vadd.f32 %v107, %v688
  %690 = vmatprep.mubr.f32.mxu0 0.0
  %691 = vmatmul.mubr.f32.gmra.mrb[0].mxu0 %v276
  %v692 = vpop.f32.mrb[0].mxu0
  %v693 = vadd.f32 %v103, %v692
  %v694 = vpop.f32.mrb[0].mxu0
  %v695 = vadd.f32 %v107, %v694
  %696 = vmatprep.mubr.f32.mxu0 0.0
  %697 = vmatmul.mubr.f32.gmra.mrb[0].mxu0 %v279
  %v698 = vpop.f32.mrb[0].mxu0
  %v699 = vadd.f32 %v103, %v698
  %v700 = vpop.f32.mrb[0].mxu0
  %v701 = vadd.f32 %v107, %v700
  %702 = vmatprep.mubr.f32.mxu0 0.0
  %703 = vmatmul.mubr.f32.gmra.mrb[0].mxu0 %v282
  %v704 = vpop.f32.mrb[0].mxu0
  %v705 = vadd.f32 %v103, %v704
  %v706 = vpop.f32.mrb[0].mxu0
  %v707 = vadd.f32 %v107, %v706
  %708 = vmatprep.mubr.f32.mxu0 0.0
  %709 = vmatmul.mubr.f32.gmra.mrb[0].mxu0 %v285
  %v710 = vpop.f32.mrb[0].mxu0
  %v711 = vadd.f32 %v103, %v710
  %v712 = vpop.f32.mrb[0].mxu0
  %v713 = vadd.f32 %v107, %v712
  %714 = vmatprep.mubr.f32.mxu0 0.0
  %715 = vmatmul.mubr.f32.gmra.mrb[0].mxu0 %v288
  %v716 = vpop.f32.mrb[0].mxu0
  %v717 = vadd.f32 %v103, %v716
  %v718 = vpop.f32.mrb[0].mxu0
  %v719 = vadd.f32 %v107, %v718
  %720 = vmatprep.mubr.f32.mxu0 0.0
  %721 = vmatmul.mubr.f32.gmra.mrb[0].mxu0 %v291
  %v722 = vpop.f32.mrb[0].mxu0
  %v723 = vadd.f32 %v103, %v722
  %v724 = vpop.f32.mrb[0].mxu0
  %v725 = vadd.f32 %v107, %v724
  %726 = vmatprep.mubr.f32.mxu0 0.0
  %727 = vmatmul.mubr.f32.gmra.mrb[0].mxu0 %v294
  %v728 = vpop.f32.mrb[0].mxu0
  %v729 = vadd.f32 %v103, %v728
  %v730 = vpop.f32.mrb[0].mxu0
  %v731 = vadd.f32 %v107, %v730
  %732 = vmatprep.mubr.f32.mxu0 0.0
  %733 = vmatmul.mubr.f32.gmra.mrb[0].mxu0 %v297
  %v734 = vpop.f32.mrb[0].mxu0
  %v735 = vadd.f32 %v103, %v734
  %v736 = vpop.f32.mrb[0].mxu0
  %v737 = vadd.f32 %v107, %v736
  %738 = vmatprep.mubr.f32.mxu0 0.0
  %739 = vmatmul.mubr.f32.gmra.mrb[0].mxu0 %v300
  %v740 = vpop.f32.mrb[0].mxu0
  %v741 = vadd.f32 %v103, %v740
  %v742 = vpop.f32.mrb[0].mxu0
  %v743 = vadd.f32 %v107, %v742
  %744 = vmatprep.mubr.f32.mxu0 0.0
  %745 = vmatmul.mubr.f32.gmra.mrb[0].mxu0 %v303
  %v746 = vpop.f32.mrb[0].mxu0
  %v747 = vadd.f32 %v103, %v746
  %v748 = vpop.f32.mrb[0].mxu0
  %v749 = vadd.f32 %v107, %v748
  %750 = vmatprep.mubr.f32.mxu0 0.0
  %751 = vmatmul.mubr.f32.gmra.mrb[0].mxu0 %v306
  %v752 = vpop.f32.mrb[0].mxu0
  %v753 = vadd.f32 %v103, %v752
  %v754 = vpop.f32.mrb[0].mxu0
  %v755 = vadd.f32 %v107, %v754
  %756 = vdwg.mxu0
  %757 = vmatprep.subr.mxu0 0.0
  %758 = vmatpush1.msra.mxu0 %v97
  %759 = vmatprep.subr.mxu0 0.0
  %760 = vmatpush1.msra.mxu0 0.0
  %761 = vmatprep.subr.mxu0 0.0
  %762 = vmatpush1.msra.mxu0 0.0
  %763 = vmatprep.subr.mxu0 0.0
  %764 = vmatpush1.msra.mxu0 0.0
  %765 = vmatprep.subr.mxu0 0.0
  %766 = vmatpush1.msra.mxu0 0.0
  %767 = vmatprep.subr.mxu0 0.0
  %768 = vmatpush1.msra.mxu0 0.0
  %769 = vmatprep.subr.mxu0 0.0
  %770 = vmatpush1.msra.mxu0 0.0
  %771 = vmatprep.subr.mxu0 0.0
  %772 = vmatpush1.msra.mxu0 0.0
  %773 = vmatprep.subr.mxu0 0.0
  %774 = vmatpush1.msra.mxu0 0.0
  %775 = vmatprep.subr.mxu0 0.0
  %776 = vmatpush1.msra.mxu0 0.0
  %777 = vmatprep.subr.mxu0 0.0
  %778 = vmatpush1.msra.mxu0 0.0
  %779 = vmatprep.subr.mxu0 0.0
  %780 = vmatpush1.msra.mxu0 0.0
  %781 = vmatprep.subr.mxu0 0.0
  %782 = vmatpush1.msra.mxu0 0.0
  %783 = vmatprep.subr.mxu0 0.0
  %784 = vmatpush1.msra.mxu0 0.0
  %785 = vmatprep.subr.mxu0 0.0
  %786 = vmatpush1.msra.mxu0 0.0
  %787 = vmatprep.subr.mxu0 0.0
  %788 = vmatpush1.msra.mxu0 0.0
  %789 = vmatprep.subr.mxu0 0.0
  %790 = vmatpush1.msra.mxu0 0.0
  %791 = vmatprep.subr.mxu0 0.0
  %792 = vmatpush1.msra.mxu0 0.0
  %793 = vmatprep.subr.mxu0 0.0
  %794 = vmatpush1.msra.mxu0 0.0
  %795 = vmatprep.subr.mxu0 0.0
  %796 = vmatpush1.msra.mxu0 0.0
  %797 = vmatprep.subr.mxu0 0.0
  %798 = vmatpush1.msra.mxu0 0.0
  %799 = vmatprep.subr.mxu0 0.0
  %800 = vmatpush1.msra.mxu0 0.0
  %801 = vmatprep.subr.mxu0 0.0
  %802 = vmatpush1.msra.mxu0 0.0
  %803 = vmatprep.subr.mxu0 0.0
  %804 = vmatpush1.msra.mxu0 0.0
  %805 = vmatprep.subr.mxu0 0.0
  %806 = vmatpush1.msra.mxu0 0.0
  %807 = vmatprep.subr.mxu0 0.0
  %808 = vmatpush1.msra.mxu0 0.0
  %809 = vmatprep.subr.mxu0 0.0
  %810 = vmatpush1.msra.mxu0 0.0
  %811 = vmatprep.subr.mxu0 0.0
  %812 = vmatpush1.msra.mxu0 0.0
  %813 = vmatprep.subr.mxu0 0.0
  %814 = vmatpush1.msra.mxu0 0.0
  %815 = vmatprep.subr.mxu0 0.0
  %816 = vmatpush1.msra.mxu0 0.0
  %817 = vmatprep.subr.mxu0 0.0
  %818 = vmatpush1.msra.mxu0 0.0
  %819 = vmatprep.subr.mxu0 0.0
  %820 = vmatpush1.msra.mxu0 0.0
  %821 = vmatprep.mubr.f32.mxu0 0.0
  %822 = vmatmul.mubr.f32.gmra.mrb[0].mxu0 %v117
  %v823 = vpop.f32.mrb[0].mxu0
  %v824 = vadd.f32 %v111, %v823
  %v825 = vpop.f32.mrb[0].mxu0
  %826 = vmatprep.mubr.f32.mxu0 0.0
  %827 = vmatmul.mubr.f32.gmra.mrb[0].mxu0 %v120
  %v828 = vpop.f32.mrb[0].mxu0
  %v829 = vadd.f32 %v111, %v828
  %v830 = vpop.f32.mrb[0].mxu0
  %831 = vmatprep.mubr.f32.mxu0 0.0
  %832 = vmatmul.mubr.f32.gmra.mrb[0].mxu0 %v123
  %v833 = vpop.f32.mrb[0].mxu0
  %v834 = vadd.f32 %v111, %v833
  %v835 = vpop.f32.mrb[0].mxu0
  %836 = vmatprep.mubr.f32.mxu0 0.0
  %837 = vmatmul.mubr.f32.gmra.mrb[0].mxu0 %v126
  %v838 = vpop.f32.mrb[0].mxu0
  %v839 = vadd.f32 %v111, %v838
  %v840 = vpop.f32.mrb[0].mxu0
  %841 = vmatprep.mubr.f32.mxu0 0.0
  %842 = vmatmul.mubr.f32.gmra.mrb[0].mxu0 %v129
  %v843 = vpop.f32.mrb[0].mxu0
  %v844 = vadd.f32 %v111, %v843
  %v845 = vpop.f32.mrb[0].mxu0
  %846 = vmatprep.mubr.f32.mxu0 0.0
  %847 = vmatmul.mubr.f32.gmra.mrb[0].mxu0 %v132
  %v848 = vpop.f32.mrb[0].mxu0
  %v849 = vadd.f32 %v111, %v848
  %v850 = vpop.f32.mrb[0].mxu0
  %851 = vmatprep.mubr.f32.mxu0 0.0
  %852 = vmatmul.mubr.f32.gmra.mrb[0].mxu0 %v135
  %v853 = vpop.f32.mrb[0].mxu0
  %v854 = vadd.f32 %v111, %v853
  %v855 = vpop.f32.mrb[0].mxu0
  %856 = vmatprep.mubr.f32.mxu0 0.0
  %857 = vmatmul.mubr.f32.gmra.mrb[0].mxu0 %v138
  %v858 = vpop.f32.mrb[0].mxu0
  %v859 = vadd.f32 %v111, %v858
  %v860 = vpop.f32.mrb[0].mxu0
  %861 = vmatprep.mubr.f32.mxu0 0.0
  %862 = vmatmul.mubr.f32.gmra.mrb[0].mxu0 %v141
  %v863 = vpop.f32.mrb[0].mxu0
  %v864 = vadd.f32 %v111, %v863
  %v865 = vpop.f32.mrb[0].mxu0
  %866 = vmatprep.mubr.f32.mxu0 0.0
  %867 = vmatmul.mubr.f32.gmra.mrb[0].mxu0 %v144
  %v868 = vpop.f32.mrb[0].mxu0
  %v869 = vadd.f32 %v111, %v868
  %v870 = vpop.f32.mrb[0].mxu0
  %871 = vmatprep.mubr.f32.mxu0 0.0
  %872 = vmatmul.mubr.f32.gmra.mrb[0].mxu0 %v147
  %v873 = vpop.f32.mrb[0].mxu0
  %v874 = vadd.f32 %v111, %v873
  %v875 = vpop.f32.mrb[0].mxu0
  %876 = vmatprep.mubr.f32.mxu0 0.0
  %877 = vmatmul.mubr.f32.gmra.mrb[0].mxu0 %v150
  %v878 = vpop.f32.mrb[0].mxu0
  %v879 = vadd.f32 %v111, %v878
  %v880 = vpop.f32.mrb[0].mxu0
  %881 = vmatprep.mubr.f32.mxu0 0.0
  %882 = vmatmul.mubr.f32.gmra.mrb[0].mxu0 %v153
  %v883 = vpop.f32.mrb[0].mxu0
  %v884 = vadd.f32 %v111, %v883
  %v885 = vpop.f32.mrb[0].mxu0
  %886 = vmatprep.mubr.f32.mxu0 0.0
  %887 = vmatmul.mubr.f32.gmra.mrb[0].mxu0 %v156
  %v888 = vpop.f32.mrb[0].mxu0
  %v889 = vadd.f32 %v111, %v888
  %v890 = vpop.f32.mrb[0].mxu0
  %891 = vmatprep.mubr.f32.mxu0 0.0
  %892 = vmatmul.mubr.f32.gmra.mrb[0].mxu0 %v159
  %v893 = vpop.f32.mrb[0].mxu0
  %v894 = vadd.f32 %v111, %v893
  %v895 = vpop.f32.mrb[0].mxu0
  %896 = vmatprep.mubr.f32.mxu0 0.0
  %897 = vmatmul.mubr.f32.gmra.mrb[0].mxu0 %v162
  %v898 = vpop.f32.mrb[0].mxu0
  %v899 = vadd.f32 %v111, %v898
  %v900 = vpop.f32.mrb[0].mxu0
  %901 = vmatprep.mubr.f32.mxu0 0.0
  %902 = vmatmul.mubr.f32.gmra.mrb[0].mxu0 %v165
  %v903 = vpop.f32.mrb[0].mxu0
  %v904 = vadd.f32 %v111, %v903
  %v905 = vpop.f32.mrb[0].mxu0
  %906 = vmatprep.mubr.f32.mxu0 0.0
  %907 = vmatmul.mubr.f32.gmra.mrb[0].mxu0 %v168
  %v908 = vpop.f32.mrb[0].mxu0
  %v909 = vadd.f32 %v111, %v908
  %v910 = vpop.f32.mrb[0].mxu0
  %911 = vmatprep.mubr.f32.mxu0 0.0
  %912 = vmatmul.mubr.f32.gmra.mrb[0].mxu0 %v171
  %v913 = vpop.f32.mrb[0].mxu0
  %v914 = vadd.f32 %v111, %v913
  %v915 = vpop.f32.mrb[0].mxu0
  %916 = vmatprep.mubr.f32.mxu0 0.0
  %917 = vmatmul.mubr.f32.gmra.mrb[0].mxu0 %v174
  %v918 = vpop.f32.mrb[0].mxu0
  %v919 = vadd.f32 %v111, %v918
  %v920 = vpop.f32.mrb[0].mxu0
  %921 = vmatprep.mubr.f32.mxu0 0.0
  %922 = vmatmul.mubr.f32.gmra.mrb[0].mxu0 %v177
  %v923 = vpop.f32.mrb[0].mxu0
  %v924 = vadd.f32 %v111, %v923
  %v925 = vpop.f32.mrb[0].mxu0
  %926 = vmatprep.mubr.f32.mxu0 0.0
  %927 = vmatmul.mubr.f32.gmra.mrb[0].mxu0 %v180
  %v928 = vpop.f32.mrb[0].mxu0
  %v929 = vadd.f32 %v111, %v928
  %v930 = vpop.f32.mrb[0].mxu0
  %931 = vmatprep.mubr.f32.mxu0 0.0
  %932 = vmatmul.mubr.f32.gmra.mrb[0].mxu0 %v183
  %v933 = vpop.f32.mrb[0].mxu0
  %v934 = vadd.f32 %v111, %v933
  %v935 = vpop.f32.mrb[0].mxu0
  %936 = vmatprep.mubr.f32.mxu0 0.0
  %937 = vmatmul.mubr.f32.gmra.mrb[0].mxu0 %v186
  %v938 = vpop.f32.mrb[0].mxu0
  %v939 = vadd.f32 %v111, %v938
  %v940 = vpop.f32.mrb[0].mxu0
  %941 = vmatprep.mubr.f32.mxu0 0.0
  %942 = vmatmul.mubr.f32.gmra.mrb[0].mxu0 %v189
  %v943 = vpop.f32.mrb[0].mxu0
  %v944 = vadd.f32 %v111, %v943
  %v945 = vpop.f32.mrb[0].mxu0
  %946 = vmatprep.mubr.f32.mxu0 0.0
  %947 = vmatmul.mubr.f32.gmra.mrb[0].mxu0 %v192
  %v948 = vpop.f32.mrb[0].mxu0
  %v949 = vadd.f32 %v111, %v948
  %v950 = vpop.f32.mrb[0].mxu0
  %951 = vmatprep.mubr.f32.mxu0 0.0
  %952 = vmatmul.mubr.f32.gmra.mrb[0].mxu0 %v195
  %v953 = vpop.f32.mrb[0].mxu0
  %v954 = vadd.f32 %v111, %v953
  %v955 = vpop.f32.mrb[0].mxu0
  %956 = vmatprep.mubr.f32.mxu0 0.0
  %957 = vmatmul.mubr.f32.gmra.mrb[0].mxu0 %v198
  %v958 = vpop.f32.mrb[0].mxu0
  %v959 = vadd.f32 %v111, %v958
  %v960 = vpop.f32.mrb[0].mxu0
  %961 = vmatprep.mubr.f32.mxu0 0.0
  %962 = vmatmul.mubr.f32.gmra.mrb[0].mxu0 %v201
  %v963 = vpop.f32.mrb[0].mxu0
  %v964 = vadd.f32 %v111, %v963
  %v965 = vpop.f32.mrb[0].mxu0
  %966 = vmatprep.mubr.f32.mxu0 0.0
  %967 = vmatmul.mubr.f32.gmra.mrb[0].mxu0 %v204
  %v968 = vpop.f32.mrb[0].mxu0
  %v969 = vadd.f32 %v111, %v968
  %v970 = vpop.f32.mrb[0].mxu0
  %971 = vmatprep.mubr.f32.mxu0 0.0
  %972 = vmatmul.mubr.f32.gmra.mrb[0].mxu0 %v207
  %v973 = vpop.f32.mrb[0].mxu0
  %v974 = vadd.f32 %v111, %v973
  %v975 = vpop.f32.mrb[0].mxu0
  %976 = vmatprep.mubr.f32.mxu0 0.0
  %977 = vmatmul.mubr.f32.gmra.mrb[0].mxu0 %v210
  %v978 = vpop.f32.mrb[0].mxu0
  %v979 = vadd.f32 %v111, %v978
  %v980 = vpop.f32.mrb[0].mxu0
  %981 = vmatprep.mubr.f32.mxu0 0.0
  %982 = vmatmul.mubr.f32.gmra.mrb[0].mxu0 %v213
  %v983 = vpop.f32.mrb[0].mxu0
  %v984 = vadd.f32 %v111, %v983
  %v985 = vpop.f32.mrb[0].mxu0
  %986 = vmatprep.mubr.f32.mxu0 0.0
  %987 = vmatmul.mubr.f32.gmra.mrb[0].mxu0 %v216
  %v988 = vpop.f32.mrb[0].mxu0
  %v989 = vadd.f32 %v111, %v988
  %v990 = vpop.f32.mrb[0].mxu0
  %991 = vmatprep.mubr.f32.mxu0 0.0
  %992 = vmatmul.mubr.f32.gmra.mrb[0].mxu0 %v219
  %v993 = vpop.f32.mrb[0].mxu0
  %v994 = vadd.f32 %v111, %v993
  %v995 = vpop.f32.mrb[0].mxu0
  %996 = vmatprep.mubr.f32.mxu0 0.0
  %997 = vmatmul.mubr.f32.gmra.mrb[0].mxu0 %v222
  %v998 = vpop.f32.mrb[0].mxu0
  %v999 = vadd.f32 %v111, %v998
  %v1000 = vpop.f32.mrb[0].mxu0
  %1001 = vmatprep.mubr.f32.mxu0 0.0
  %1002 = vmatmul.mubr.f32.gmra.mrb[0].mxu0 %v225
  %v1003 = vpop.f32.mrb[0].mxu0
  %v1004 = vadd.f32 %v111, %v1003
  %v1005 = vpop.f32.mrb[0].mxu0
  %1006 = vmatprep.mubr.f32.mxu0 0.0
  %1007 = vmatmul.mubr.f32.gmra.mrb[0].mxu0 %v228
  %v1008 = vpop.f32.mrb[0].mxu0
  %v1009 = vadd.f32 %v111, %v1008
  %v1010 = vpop.f32.mrb[0].mxu0
  %1011 = vmatprep.mubr.f32.mxu0 0.0
  %1012 = vmatmul.mubr.f32.gmra.mrb[0].mxu0 %v231
  %v1013 = vpop.f32.mrb[0].mxu0
  %v1014 = vadd.f32 %v111, %v1013
  %v1015 = vpop.f32.mrb[0].mxu0
  %1016 = vmatprep.mubr.f32.mxu0 0.0
  %1017 = vmatmul.mubr.f32.gmra.mrb[0].mxu0 %v234
  %v1018 = vpop.f32.mrb[0].mxu0
  %v1019 = vadd.f32 %v111, %v1018
  %v1020 = vpop.f32.mrb[0].mxu0
  %1021 = vmatprep.mubr.f32.mxu0 0.0
  %1022 = vmatmul.mubr.f32.gmra.mrb[0].mxu0 %v237
  %v1023 = vpop.f32.mrb[0].mxu0
  %v1024 = vadd.f32 %v111, %v1023
  %v1025 = vpop.f32.mrb[0].mxu0
  %1026 = vmatprep.mubr.f32.mxu0 0.0
  %1027 = vmatmul.mubr.f32.gmra.mrb[0].mxu0 %v240
  %v1028 = vpop.f32.mrb[0].mxu0
  %v1029 = vadd.f32 %v111, %v1028
  %v1030 = vpop.f32.mrb[0].mxu0
  %1031 = vmatprep.mubr.f32.mxu0 0.0
  %1032 = vmatmul.mubr.f32.gmra.mrb[0].mxu0 %v243
  %v1033 = vpop.f32.mrb[0].mxu0
  %v1034 = vadd.f32 %v111, %v1033
  %v1035 = vpop.f32.mrb[0].mxu0
  %1036 = vmatprep.mubr.f32.mxu0 0.0
  %1037 = vmatmul.mubr.f32.gmra.mrb[0].mxu0 %v246
  %v1038 = vpop.f32.mrb[0].mxu0
  %v1039 = vadd.f32 %v111, %v1038
  %v1040 = vpop.f32.mrb[0].mxu0
  %1041 = vmatprep.mubr.f32.mxu0 0.0
  %1042 = vmatmul.mubr.f32.gmra.mrb[0].mxu0 %v249
  %v1043 = vpop.f32.mrb[0].mxu0
  %v1044 = vadd.f32 %v111, %v1043
  %v1045 = vpop.f32.mrb[0].mxu0
  %1046 = vmatprep.mubr.f32.mxu0 0.0
  %1047 = vmatmul.mubr.f32.gmra.mrb[0].mxu0 %v252
  %v1048 = vpop.f32.mrb[0].mxu0
  %v1049 = vadd.f32 %v111, %v1048
  %v1050 = vpop.f32.mrb[0].mxu0
  %1051 = vmatprep.mubr.f32.mxu0 0.0
  %1052 = vmatmul.mubr.f32.gmra.mrb[0].mxu0 %v255
  %v1053 = vpop.f32.mrb[0].mxu0
  %v1054 = vadd.f32 %v111, %v1053
  %v1055 = vpop.f32.mrb[0].mxu0
  %1056 = vmatprep.mubr.f32.mxu0 0.0
  %1057 = vmatmul.mubr.f32.gmra.mrb[0].mxu0 %v258
  %v1058 = vpop.f32.mrb[0].mxu0
  %v1059 = vadd.f32 %v111, %v1058
  %v1060 = vpop.f32.mrb[0].mxu0
  %1061 = vmatprep.mubr.f32.mxu0 0.0
  %1062 = vmatmul.mubr.f32.gmra.mrb[0].mxu0 %v261
  %v1063 = vpop.f32.mrb[0].mxu0
  %v1064 = vadd.f32 %v111, %v1063
  %v1065 = vpop.f32.mrb[0].mxu0
  %1066 = vmatprep.mubr.f32.mxu0 0.0
  %1067 = vmatmul.mubr.f32.gmra.mrb[0].mxu0 %v264
  %v1068 = vpop.f32.mrb[0].mxu0
  %v1069 = vadd.f32 %v111, %v1068
  %v1070 = vpop.f32.mrb[0].mxu0
  %1071 = vmatprep.mubr.f32.mxu0 0.0
  %1072 = vmatmul.mubr.f32.gmra.mrb[0].mxu0 %v267
  %v1073 = vpop.f32.mrb[0].mxu0
  %v1074 = vadd.f32 %v111, %v1073
  %v1075 = vpop.f32.mrb[0].mxu0
  %1076 = vmatprep.mubr.f32.mxu0 0.0
  %1077 = vmatmul.mubr.f32.gmra.mrb[0].mxu0 %v270
  %v1078 = vpop.f32.mrb[0].mxu0
  %v1079 = vadd.f32 %v111, %v1078
  %v1080 = vpop.f32.mrb[0].mxu0
  %1081 = vmatprep.mubr.f32.mxu0 0.0
  %1082 = vmatmul.mubr.f32.gmra.mrb[0].mxu0 %v273
  %v1083 = vpop.f32.mrb[0].mxu0
  %v1084 = vadd.f32 %v111, %v1083
  %v1085 = vpop.f32.mrb[0].mxu0
  %1086 = vmatprep.mubr.f32.mxu0 0.0
  %1087 = vmatmul.mubr.f32.gmra.mrb[0].mxu0 %v276
  %v1088 = vpop.f32.mrb[0].mxu0
  %v1089 = vadd.f32 %v111, %v1088
  %v1090 = vpop.f32.mrb[0].mxu0
  %1091 = vmatprep.mubr.f32.mxu0 0.0
  %1092 = vmatmul.mubr.f32.gmra.mrb[0].mxu0 %v279
  %v1093 = vpop.f32.mrb[0].mxu0
  %v1094 = vadd.f32 %v111, %v1093
  %v1095 = vpop.f32.mrb[0].mxu0
  %1096 = vmatprep.mubr.f32.mxu0 0.0
  %1097 = vmatmul.mubr.f32.gmra.mrb[0].mxu0 %v282
  %v1098 = vpop.f32.mrb[0].mxu0
  %v1099 = vadd.f32 %v111, %v1098
  %v1100 = vpop.f32.mrb[0].mxu0
  %1101 = vmatprep.mubr.f32.mxu0 0.0
  %1102 = vmatmul.mubr.f32.gmra.mrb[0].mxu0 %v285
  %v1103 = vpop.f32.mrb[0].mxu0
  %v1104 = vadd.f32 %v111, %v1103
  %v1105 = vpop.f32.mrb[0].mxu0
  %1106 = vmatprep.mubr.f32.mxu0 0.0
  %1107 = vmatmul.mubr.f32.gmra.mrb[0].mxu0 %v288
  %v1108 = vpop.f32.mrb[0].mxu0
  %v1109 = vadd.f32 %v111, %v1108
  %v1110 = vpop.f32.mrb[0].mxu0
  %1111 = vmatprep.mubr.f32.mxu0 0.0
  %1112 = vmatmul.mubr.f32.gmra.mrb[0].mxu0 %v291
  %v1113 = vpop.f32.mrb[0].mxu0
  %v1114 = vadd.f32 %v111, %v1113
  %v1115 = vpop.f32.mrb[0].mxu0
  %1116 = vmatprep.mubr.f32.mxu0 0.0
  %1117 = vmatmul.mubr.f32.gmra.mrb[0].mxu0 %v294
  %v1118 = vpop.f32.mrb[0].mxu0
  %v1119 = vadd.f32 %v111, %v1118
  %v1120 = vpop.f32.mrb[0].mxu0
  %1121 = vmatprep.mubr.f32.mxu0 0.0
  %1122 = vmatmul.mubr.f32.gmra.mrb[0].mxu0 %v297
  %v1123 = vpop.f32.mrb[0].mxu0
  %v1124 = vadd.f32 %v111, %v1123
  %v1125 = vpop.f32.mrb[0].mxu0
  %1126 = vmatprep.mubr.f32.mxu0 0.0
  %1127 = vmatmul.mubr.f32.gmra.mrb[0].mxu0 %v300
  %v1128 = vpop.f32.mrb[0].mxu0
  %v1129 = vadd.f32 %v111, %v1128
  %v1130 = vpop.f32.mrb[0].mxu0
  %1131 = vmatprep.mubr.f32.mxu0 0.0
  %1132 = vmatmul.mubr.f32.gmra.mrb[0].mxu0 %v303
  %v1133 = vpop.f32.mrb[0].mxu0
  %v1134 = vadd.f32 %v111, %v1133
  %v1135 = vpop.f32.mrb[0].mxu0
  %1136 = vmatprep.mubr.f32.mxu0 0.0
  %1137 = vmatmul.mubr.f32.gmra.mrb[0].mxu0 %v306
  %v1138 = vpop.f32.mrb[0].mxu0
  %v1139 = vadd.f32 %v111, %v1138
  %v1140 = vpop.f32.mrb[0].mxu0
  %1141 = vdwg.mxu0
  %1142 = vst [vmem:[#allocation3] sm:$0xff] %v375
  %1143 = vst [vmem:[#allocation3 + $0x8] sm:$0xff] %v377
  %1144 = vst [vmem:[#allocation3 + $0x10] sm:$0xff] %v824
  %1145 = vst [vmem:[#allocation3 + $0x18] sm:$0xff] %v381
  %1146 = vst [vmem:[#allocation3 + $0x20] sm:$0xff] %v383
  %1147 = vst [vmem:[#allocation3 + $0x28] sm:$0xff] %v829
  %1148 = vst [vmem:[#allocation3 + $0x30] sm:$0xff] %v387
  %1149 = vst [vmem:[#allocation3 + $0x38] sm:$0xff] %v389
  %1150 = vst [vmem:[#allocation3 + $0x40] sm:$0xff] %v834
  %1151 = vst [vmem:[#allocation3 + $0x48] sm:$0xff] %v393
  %1152 = vst [vmem:[#allocation3 + $0x50] sm:$0xff] %v395
  %1153 = vst [vmem:[#allocation3 + $0x58] sm:$0xff] %v839
  %1154 = vst [vmem:[#allocation3 + $0x60] sm:$0xff] %v399
  %1155 = vst [vmem:[#allocation3 + $0x68] sm:$0xff] %v401
  %1156 = vst [vmem:[#allocation3 + $0x70] sm:$0xff] %v844
  %1157 = vst [vmem:[#allocation3 + $0x78] sm:$0xff] %v405
  %1158 = vst [vmem:[#allocation3 + $0x80] sm:$0xff] %v407
  %1159 = vst [vmem:[#allocation3 + $0x88] sm:$0xff] %v849
  %1160 = vst [vmem:[#allocation3 + $0x90] sm:$0xff] %v411
  %1161 = vst [vmem:[#allocation3 + $0x98] sm:$0xff] %v413
  %1162 = vst [vmem:[#allocation3 + $0xa0] sm:$0xff] %v854
  %1163 = vst [vmem:[#allocation3 + $0xa8] sm:$0xff] %v417
  %1164 = vst [vmem:[#allocation3 + $0xb0] sm:$0xff] %v419
  %1165 = vst [vmem:[#allocation3 + $0xb8] sm:$0xff] %v859
  %1166 = vst [vmem:[#allocation3 + $0xc0] sm:$0xff] %v423
  %1167 = vst [vmem:[#allocation3 + $0xc8] sm:$0xff] %v425
  %1168 = vst [vmem:[#allocation3 + $0xd0] sm:$0xff] %v864
  %1169 = vst [vmem:[#allocation3 + $0xd8] sm:$0xff] %v429
  %1170 = vst [vmem:[#allocation3 + $0xe0] sm:$0xff] %v431
  %1171 = vst [vmem:[#allocation3 + $0xe8] sm:$0xff] %v869
  %1172 = vst [vmem:[#allocation3 + $0xf0] sm:$0xff] %v435
  %1173 = vst [vmem:[#allocation3 + $0xf8] sm:$0xff] %v437
  %1174 = vst [vmem:[#allocation3 + $0x100] sm:$0xff] %v874
  %1175 = vst [vmem:[#allocation3 + $0x108] sm:$0xff] %v441
  %1176 = vst [vmem:[#allocation3 + $0x110] sm:$0xff] %v443
  %1177 = vst [vmem:[#allocation3 + $0x118] sm:$0xff] %v879
  %1178 = vst [vmem:[#allocation3 + $0x120] sm:$0xff] %v447
  %1179 = vst [vmem:[#allocation3 + $0x128] sm:$0xff] %v449
  %1180 = vst [vmem:[#allocation3 + $0x130] sm:$0xff] %v884
  %1181 = vst [vmem:[#allocation3 + $0x138] sm:$0xff] %v453
  %1182 = vst [vmem:[#allocation3 + $0x140] sm:$0xff] %v455
  %1183 = vst [vmem:[#allocation3 + $0x148] sm:$0xff] %v889
  %1184 = vst [vmem:[#allocation3 + $0x150] sm:$0xff] %v459
  %1185 = vst [vmem:[#allocation3 + $0x158] sm:$0xff] %v461
  %1186 = vst [vmem:[#allocation3 + $0x160] sm:$0xff] %v894
  %1187 = vst [vmem:[#allocation3 + $0x168] sm:$0xff] %v465
  %1188 = vst [vmem:[#allocation3 + $0x170] sm:$0xff] %v467
  %1189 = vst [vmem:[#allocation3 + $0x178] sm:$0xff] %v899
  %1190 = vst [vmem:[#allocation3 + $0x180] sm:$0xff] %v471
  %1191 = vst [vmem:[#allocation3 + $0x188] sm:$0xff] %v473
  %1192 = vst [vmem:[#allocation3 + $0x190] sm:$0xff] %v904
  %1193 = vst [vmem:[#allocation3 + $0x198] sm:$0xff] %v477
  %1194 = vst [vmem:[#allocation3 + $0x1a0] sm:$0xff] %v479
  %1195 = vst [vmem:[#allocation3 + $0x1a8] sm:$0xff] %v909
  %1196 = vst [vmem:[#allocation3 + $0x1b0] sm:$0xff] %v483
  %1197 = vst [vmem:[#allocation3 + $0x1b8] sm:$0xff] %v485
  %1198 = vst [vmem:[#allocation3 + $0x1c0] sm:$0xff] %v914
  %1199 = vst [vmem:[#allocation3 + $0x1c8] sm:$0xff] %v489
  %1200 = vst [vmem:[#allocation3 + $0x1d0] sm:$0xff] %v491
  %1201 = vst [vmem:[#allocation3 + $0x1d8] sm:$0xff] %v919
  %1202 = vst [vmem:[#allocation3 + $0x1e0] sm:$0xff] %v495
  %1203 = vst [vmem:[#allocation3 + $0x1e8] sm:$0xff] %v497
  %1204 = vst [vmem:[#allocation3 + $0x1f0] sm:$0xff] %v924
  %1205 = vst [vmem:[#allocation3 + $0x1f8] sm:$0xff] %v501
  %1206 = vst [vmem:[#allocation3 + $0x200] sm:$0xff] %v503
  %1207 = vst [vmem:[#allocation3 + $0x208] sm:$0xff] %v929
  %1208 = vst [vmem:[#allocation3 + $0x210] sm:$0xff] %v507
  %1209 = vst [vmem:[#allocation3 + $0x218] sm:$0xff] %v509
  %1210 = vst [vmem:[#allocation3 + $0x220] sm:$0xff] %v934
  %1211 = vst [vmem:[#allocation3 + $0x228] sm:$0xff] %v513
  %1212 = vst [vmem:[#allocation3 + $0x230] sm:$0xff] %v515
  %1213 = vst [vmem:[#allocation3 + $0x238] sm:$0xff] %v939
  %1214 = vst [vmem:[#allocation3 + $0x240] sm:$0xff] %v519
  %1215 = vst [vmem:[#allocation3 + $0x248] sm:$0xff] %v521
  %1216 = vst [vmem:[#allocation3 + $0x250] sm:$0xff] %v944
  %1217 = vst [vmem:[#allocation3 + $0x258] sm:$0xff] %v525
  %1218 = vst [vmem:[#allocation3 + $0x260] sm:$0xff] %v527
  %1219 = vst [vmem:[#allocation3 + $0x268] sm:$0xff] %v949
  %1220 = vst [vmem:[#allocation3 + $0x270] sm:$0xff] %v531
  %1221 = vst [vmem:[#allocation3 + $0x278] sm:$0xff] %v533
  %1222 = vst [vmem:[#allocation3 + $0x280] sm:$0xff] %v954
  %1223 = vst [vmem:[#allocation3 + $0x288] sm:$0xff] %v537
  %1224 = vst [vmem:[#allocation3 + $0x290] sm:$0xff] %v539
  %1225 = vst [vmem:[#allocation3 + $0x298] sm:$0xff] %v959
  %1226 = vst [vmem:[#allocation3 + $0x2a0] sm:$0xff] %v543
  %1227 = vst [vmem:[#allocation3 + $0x2a8] sm:$0xff] %v545
  %1228 = vst [vmem:[#allocation3 + $0x2b0] sm:$0xff] %v964
  %1229 = vst [vmem:[#allocation3 + $0x2b8] sm:$0xff] %v549
  %1230 = vst [vmem:[#allocation3 + $0x2c0] sm:$0xff] %v551
  %1231 = vst [vmem:[#allocation3 + $0x2c8] sm:$0xff] %v969
  %1232 = vst [vmem:[#allocation3 + $0x2d0] sm:$0xff] %v555
  %1233 = vst [vmem:[#allocation3 + $0x2d8] sm:$0xff] %v557
  %1234 = vst [vmem:[#allocation3 + $0x2e0] sm:$0xff] %v974
  %1235 = vst [vmem:[#allocation3 + $0x2e8] sm:$0xff] %v561
  %1236 = vst [vmem:[#allocation3 + $0x2f0] sm:$0xff] %v563
  %1237 = vst [vmem:[#allocation3 + $0x2f8] sm:$0xff] %v979
  %1238 = vst [vmem:[#allocation3 + $0x300] sm:$0xff] %v567
  %1239 = vst [vmem:[#allocation3 + $0x308] sm:$0xff] %v569
  %1240 = vst [vmem:[#allocation3 + $0x310] sm:$0xff] %v984
  %1241 = vst [vmem:[#allocation3 + $0x318] sm:$0xff] %v573
  %1242 = vst [vmem:[#allocation3 + $0x320] sm:$0xff] %v575
  %1243 = vst [vmem:[#allocation3 + $0x328] sm:$0xff] %v989
  %1244 = vst [vmem:[#allocation3 + $0x330] sm:$0xff] %v579
  %1245 = vst [vmem:[#allocation3 + $0x338] sm:$0xff] %v581
  %1246 = vst [vmem:[#allocation3 + $0x340] sm:$0xff] %v994
  %1247 = vst [vmem:[#allocation3 + $0x348] sm:$0xff] %v585
  %1248 = vst [vmem:[#allocation3 + $0x350] sm:$0xff] %v587
  %1249 = vst [vmem:[#allocation3 + $0x358] sm:$0xff] %v999
  %1250 = vst [vmem:[#allocation3 + $0x360] sm:$0xff] %v591
  %1251 = vst [vmem:[#allocation3 + $0x368] sm:$0xff] %v593
  %1252 = vst [vmem:[#allocation3 + $0x370] sm:$0xff] %v1004
  %1253 = vst [vmem:[#allocation3 + $0x378] sm:$0xff] %v597
  %1254 = vst [vmem:[#allocation3 + $0x380] sm:$0xff] %v599
  %1255 = vst [vmem:[#allocation3 + $0x388] sm:$0xff] %v1009
  %1256 = vst [vmem:[#allocation3 + $0x390] sm:$0xff] %v603
  %1257 = vst [vmem:[#allocation3 + $0x398] sm:$0xff] %v605
  %1258 = vst [vmem:[#allocation3 + $0x3a0] sm:$0xff] %v1014
  %1259 = vst [vmem:[#allocation3 + $0x3a8] sm:$0xff] %v609
  %1260 = vst [vmem:[#allocation3 + $0x3b0] sm:$0xff] %v611
  %1261 = vst [vmem:[#allocation3 + $0x3b8] sm:$0xff] %v1019
  %1262 = vst [vmem:[#allocation3 + $0x3c0] sm:$0xff] %v615
  %1263 = vst [vmem:[#allocation3 + $0x3c8] sm:$0xff] %v617
  %1264 = vst [vmem:[#allocation3 + $0x3d0] sm:$0xff] %v1024
  %1265 = vst [vmem:[#allocation3 + $0x3d8] sm:$0xff] %v621
  %1266 = vst [vmem:[#allocation3 + $0x3e0] sm:$0xff] %v623
  %1267 = vst [vmem:[#allocation3 + $0x3e8] sm:$0xff] %v1029
  %1268 = vst [vmem:[#allocation3 + $0x3f0] sm:$0xff] %v627
  %1269 = vst [vmem:[#allocation3 + $0x3f8] sm:$0xff] %v629
  %1270 = vst [vmem:[#allocation3 + $0x400] sm:$0xff] %v1034
  %1271 = vst [vmem:[#allocation3 + $0x408] sm:$0xff] %v633
  %1272 = vst [vmem:[#allocation3 + $0x410] sm:$0xff] %v635
  %1273 = vst [vmem:[#allocation3 + $0x418] sm:$0xff] %v1039
  %1274 = vst [vmem:[#allocation3 + $0x420] sm:$0xff] %v639
  %1275 = vst [vmem:[#allocation3 + $0x428] sm:$0xff] %v641
  %1276 = vst [vmem:[#allocation3 + $0x430] sm:$0xff] %v1044
  %1277 = vst [vmem:[#allocation3 + $0x438] sm:$0xff] %v645
  %1278 = vst [vmem:[#allocation3 + $0x440] sm:$0xff] %v647
  %1279 = vst [vmem:[#allocation3 + $0x448] sm:$0xff] %v1049
  %1280 = vst [vmem:[#allocation3 + $0x450] sm:$0xff] %v651
  %1281 = vst [vmem:[#allocation3 + $0x458] sm:$0xff] %v653
  %1282 = vst [vmem:[#allocation3 + $0x460] sm:$0xff] %v1054
  %1283 = vst [vmem:[#allocation3 + $0x468] sm:$0xff] %v657
  %1284 = vst [vmem:[#allocation3 + $0x470] sm:$0xff] %v659
  %1285 = vst [vmem:[#allocation3 + $0x478] sm:$0xff] %v1059
  %1286 = vst [vmem:[#allocation3 + $0x480] sm:$0xff] %v663
  %1287 = vst [vmem:[#allocation3 + $0x488] sm:$0xff] %v665
  %1288 = vst [vmem:[#allocation3 + $0x490] sm:$0xff] %v1064
  %1289 = vst [vmem:[#allocation3 + $0x498] sm:$0xff] %v669
  %1290 = vst [vmem:[#allocation3 + $0x4a0] sm:$0xff] %v671
  %1291 = vst [vmem:[#allocation3 + $0x4a8] sm:$0xff] %v1069
  %1292 = vst [vmem:[#allocation3 + $0x4b0] sm:$0xff] %v675
  %1293 = vst [vmem:[#allocation3 + $0x4b8] sm:$0xff] %v677
  %1294 = vst [vmem:[#allocation3 + $0x4c0] sm:$0xff] %v1074
  %1295 = vst [vmem:[#allocation3 + $0x4c8] sm:$0xff] %v681
  %1296 = vst [vmem:[#allocation3 + $0x4d0] sm:$0xff] %v683
  %1297 = vst [vmem:[#allocation3 + $0x4d8] sm:$0xff] %v1079
  %1298 = vst [vmem:[#allocation3 + $0x4e0] sm:$0xff] %v687
  %1299 = vst [vmem:[#allocation3 + $0x4e8] sm:$0xff] %v689
  %1300 = vst [vmem:[#allocation3 + $0x4f0] sm:$0xff] %v1084
  %1301 = vst [vmem:[#allocation3 + $0x4f8] sm:$0xff] %v693
  %1302 = vst [vmem:[#allocation3 + $0x500] sm:$0xff] %v695
  %1303 = vst [vmem:[#allocation3 + $0x508] sm:$0xff] %v1089
  %1304 = vst [vmem:[#allocation3 + $0x510] sm:$0xff] %v699
  %1305 = vst [vmem:[#allocation3 + $0x518] sm:$0xff] %v701
  %1306 = vst [vmem:[#allocation3 + $0x520] sm:$0xff] %v1094
  %1307 = vst [vmem:[#allocation3 + $0x528] sm:$0xff] %v705
  %1308 = vst [vmem:[#allocation3 + $0x530] sm:$0xff] %v707
  %1309 = vst [vmem:[#allocation3 + $0x538] sm:$0xff] %v1099
  %1310 = vst [vmem:[#allocation3 + $0x540] sm:$0xff] %v711
  %1311 = vst [vmem:[#allocation3 + $0x548] sm:$0xff] %v713
  %1312 = vst [vmem:[#allocation3 + $0x550] sm:$0xff] %v1104
  %1313 = vst [vmem:[#allocation3 + $0x558] sm:$0xff] %v717
  %1314 = vst [vmem:[#allocation3 + $0x560] sm:$0xff] %v719
  %1315 = vst [vmem:[#allocation3 + $0x568] sm:$0xff] %v1109
  %1316 = vst [vmem:[#allocation3 + $0x570] sm:$0xff] %v723
  %1317 = vst [vmem:[#allocation3 + $0x578] sm:$0xff] %v725
  %1318 = vst [vmem:[#allocation3 + $0x580] sm:$0xff] %v1114
  %1319 = vst [vmem:[#allocation3 + $0x588] sm:$0xff] %v729
  %1320 = vst [vmem:[#allocation3 + $0x590] sm:$0xff] %v731
  %1321 = vst [vmem:[#allocation3 + $0x598] sm:$0xff] %v1119
  %1322 = vst [vmem:[#allocation3 + $0x5a0] sm:$0xff] %v735
  %1323 = vst [vmem:[#allocation3 + $0x5a8] sm:$0xff] %v737
  %1324 = vst [vmem:[#allocation3 + $0x5b0] sm:$0xff] %v1124
  %1325 = vst [vmem:[#allocation3 + $0x5b8] sm:$0xff] %v741
  %1326 = vst [vmem:[#allocation3 + $0x5c0] sm:$0xff] %v743
  %1327 = vst [vmem:[#allocation3 + $0x5c8] sm:$0xff] %v1129
  %1328 = vst [vmem:[#allocation3 + $0x5d0] sm:$0xff] %v747
  %1329 = vst [vmem:[#allocation3 + $0x5d8] sm:$0xff] %v749
  %1330 = vst [vmem:[#allocation3 + $0x5e0] sm:$0xff] %v1134
  %1331 = vst [vmem:[#allocation3 + $0x5e8] sm:$0xff] %v753
  %1332 = vst [vmem:[#allocation3 + $0x5f0] sm:$0xff] %v755
  %1333 = vst [vmem:[#allocation3 + $0x5f8] sm:$0xff] %v1139
  %v1334 = vld [vmem:[%s2] sm:$0xff]
  %v1335 = vld [vmem:[%s2 + $0x8] sm:$0xff]
  %v1336 = vld [vmem:[%s2 + $0x10] sm:$0xff]
  %v1337 = vld [vmem:[%s2 + $0x18] sm:$0xff]
  %v1338 = vld [vmem:[%s2 + $0x20] sm:$0xff]
  %v1339 = vld [vmem:[%s2 + $0x28] sm:$0xff]
  %v1340 = vld [vmem:[%s2 + $0x30] sm:$0xff]
  %v1341 = vld [vmem:[%s2 + $0x38] sm:$0xff]
  %v1342 = vld [vmem:[%s2 + $0x40] sm:$0xff]
  %v1343 = vld [vmem:[%s2 + $0x48] sm:$0xff]
  %v1344 = vld [vmem:[%s2 + $0x50] sm:$0xff]
  %v1345 = vld [vmem:[%s2 + $0x58] sm:$0xff]
  %v1346 = vld [vmem:[%s2 + $0x60] sm:$0xff]
  %v1347 = vld [vmem:[%s2 + $0x68] sm:$0xff]
  %v1348 = vld [vmem:[%s2 + $0x70] sm:$0xff]
  %v1349 = vld [vmem:[%s2 + $0x78] sm:$0xff]
  %v1350 = vld [vmem:[%s2 + $0x80] sm:$0xff]
  %v1351 = vld [vmem:[%s2 + $0x88] sm:$0xff]
  %v1352 = vld [vmem:[%s2 + $0x90] sm:$0xff]
  %v1353 = vld [vmem:[%s2 + $0x98] sm:$0xff]
  %v1354 = vld [vmem:[%s2 + $0xa0] sm:$0xff]
  %v1355 = vld [vmem:[%s2 + $0xa8] sm:$0xff]
  %v1356 = vld [vmem:[%s2 + $0xb0] sm:$0xff]
  %v1357 = vld [vmem:[%s2 + $0xb8] sm:$0xff]
  %v1358 = vld [vmem:[%s2 + $0xc0] sm:$0xff]
  %v1359 = vld [vmem:[%s2 + $0xc8] sm:$0xff]
  %v1360 = vld [vmem:[%s2 + $0xd0] sm:$0xff]
  %v1361 = vld [vmem:[%s2 + $0xd8] sm:$0xff]
  %v1362 = vld [vmem:[%s2 + $0xe0] sm:$0xff]
  %v1363 = vld [vmem:[%s2 + $0xe8] sm:$0xff]
  %v1364 = vld [vmem:[%s2 + $0xf0] sm:$0xff]
  %v1365 = vld [vmem:[%s2 + $0xf8] sm:$0xff]
  %v1366 = vld [vmem:[%s2 + $0x100] sm:$0xff]
  %v1367 = vld [vmem:[%s2 + $0x108] sm:$0xff]
  %v1368 = vld [vmem:[%s2 + $0x110] sm:$0xff]
  %v1369 = vld [vmem:[%s2 + $0x118] sm:$0xff]
  %v1370 = vld [vmem:[%s2 + $0x120] sm:$0xff]
  %v1371 = vld [vmem:[%s2 + $0x128] sm:$0xff]
  %v1372 = vld [vmem:[%s2 + $0x130] sm:$0xff]
  %v1373 = vld [vmem:[%s2 + $0x138] sm:$0xff]
  %v1374 = vld [vmem:[%s2 + $0x140] sm:$0xff]
  %v1375 = vld [vmem:[%s2 + $0x148] sm:$0xff]
  %v1376 = vld [vmem:[%s2 + $0x150] sm:$0xff]
  %v1377 = vld [vmem:[%s2 + $0x158] sm:$0xff]
  %v1378 = vld [vmem:[%s2 + $0x160] sm:$0xff]
  %v1379 = vld [vmem:[%s2 + $0x168] sm:$0xff]
  %v1380 = vld [vmem:[%s2 + $0x170] sm:$0xff]
  %v1381 = vld [vmem:[%s2 + $0x178] sm:$0xff]
  %v1382 = vld [vmem:[%s4] sm:$0xff]
  %v1383 = vld [vmem:[#allocation2] sm:$0xff]
  loop: start=0, step=1, limit=64
  $region34: #{gru_model_forward.1} parent=0 // loop_pre_header
    _
  $region35: #{gru_model_forward.1} parent=0 // loop_header
    %s1385 = sphi 0, %s1389
    %p1386 = scmp.ge.s32.totalorder %s1385, 64
    %v1390 = vphi %v1383, %v1558
  $region36: #{gru_model_forward.1} parent=0 // loop_header_branch
    %1388 = sbr.rel (%p1386) target = $region40
  $region37: #{gru_model_forward.1} parent=0 // loop_body
    %s1391 = smul.u32 %s1385, 8
    %s1392 = sshra.s32 %s1391, 3
    %s1393 = sand.u32 %s1391, 7
    %s1394 = smul.u32 %s1392, 3
    %s1395 = smul.addr %s1394, 8
    %s1396 = scalar_lea.vmem [#allocation3], %s1395
    %v1397 = vld [vmem:[%s1396] sm:$0xff]
    %v1398 = vld [vmem:[%s1396 + $0x8] sm:$0xff]
    %v1399 = vld [vmem:[%s1396 + $0x10] sm:$0xff]
    %1400 = vmatprep.subr.mxu0 %v1335
    %1401 = vmatpush1.msra.mxu0 %v1334
    %1402 = vmatprep.subr.mxu0 %v1338
    %1403 = vmatpush1.msra.mxu0 %v1337
    %1404 = vmatprep.subr.mxu0 %v1341
    %1405 = vmatpush1.msra.mxu0 %v1340
    %1406 = vmatprep.subr.mxu0 %v1344
    %1407 = vmatpush1.msra.mxu0 %v1343
    %1408 = vmatprep.subr.mxu0 %v1347
    %1409 = vmatpush1.msra.mxu0 %v1346
    %1410 = vmatprep.subr.mxu0 %v1350
    %1411 = vmatpush1.msra.mxu0 %v1349
    %1412 = vmatprep.subr.mxu0 %v1353
    %1413 = vmatpush1.msra.mxu0 %v1352
    %1414 = vmatprep.subr.mxu0 %v1356
    %1415 = vmatpush1.msra.mxu0 %v1355
    %1416 = vmatprep.subr.mxu0 %v1359
    %1417 = vmatpush1.msra.mxu0 %v1358
    %1418 = vmatprep.subr.mxu0 %v1362
    %1419 = vmatpush1.msra.mxu0 %v1361
    %1420 = vmatprep.subr.mxu0 %v1365
    %1421 = vmatpush1.msra.mxu0 %v1364
    %1422 = vmatprep.subr.mxu0 %v1368
    %1423 = vmatpush1.msra.mxu0 %v1367
    %1424 = vmatprep.subr.mxu0 %v1371
    %1425 = vmatpush1.msra.mxu0 %v1370
    %1426 = vmatprep.subr.mxu0 %v1374
    %1427 = vmatpush1.msra.mxu0 %v1373
    %1428 = vmatprep.subr.mxu0 %v1377
    %1429 = vmatpush1.msra.mxu0 %v1376
    %1430 = vmatprep.subr.mxu0 %v1380
    %1431 = vmatpush1.msra.mxu0 %v1379
    %1432 = vmatprep.subr.mxu0 0.0
    %1433 = vmatpush1.msra.mxu0 0.0
    %1434 = vmatprep.subr.mxu0 0.0
    %1435 = vmatpush1.msra.mxu0 0.0
    %1436 = vmatprep.subr.mxu0 0.0
    %1437 = vmatpush1.msra.mxu0 0.0
    %1438 = vmatprep.subr.mxu0 0.0
    %1439 = vmatpush1.msra.mxu0 0.0
    %1440 = vmatprep.subr.mxu0 0.0
    %1441 = vmatpush1.msra.mxu0 0.0
    %1442 = vmatprep.subr.mxu0 0.0
    %1443 = vmatpush1.msra.mxu0 0.0
    %1444 = vmatprep.subr.mxu0 0.0
    %1445 = vmatpush1.msra.mxu0 0.0
    %1446 = vmatprep.subr.mxu0 0.0
    %1447 = vmatpush1.msra.mxu0 0.0
    %1448 = vmatprep.subr.mxu0 0.0
    %1449 = vmatpush1.msra.mxu0 0.0
    %1450 = vmatprep.subr.mxu0 0.0
    %1451 = vmatpush1.msra.mxu0 0.0
    %1452 = vmatprep.subr.mxu0 0.0
    %1453 = vmatpush1.msra.mxu0 0.0
    %1454 = vmatprep.subr.mxu0 0.0
    %1455 = vmatpush1.msra.mxu0 0.0
    %1456 = vmatprep.subr.mxu0 0.0
    %1457 = vmatpush1.msra.mxu0 0.0
    %1458 = vmatprep.subr.mxu0 0.0
    %1459 = vmatpush1.msra.mxu0 0.0
    %1460 = vmatprep.subr.mxu0 0.0
    %1461 = vmatpush1.msra.mxu0 0.0
    %1462 = vmatprep.subr.mxu0 0.0
    %1463 = vmatpush1.msra.mxu0 0.0
    %1464 = vmatprep.mubr.f32.mxu0 0.0
    %1465 = vmatmul.mubr.f32.gmra.mrb[0].mxu0 %v1390
    %v1466 = vpop.f32.mrb[0].mxu0
    %v1467 = vadd.f32 0.0, %v1466
    %v1468 = vpop.f32.mrb[0].mxu0
    %v1469 = vadd.f32 0.0, %v1468
    %1470 = vdwg.mxu0
    %1471 = vmatprep.subr.mxu0 0.0
    %1472 = vmatpush1.msra.mxu0 %v1336
    %1473 = vmatprep.subr.mxu0 0.0
    %1474 = vmatpush1.msra.mxu0 %v1339
    %1475 = vmatprep.subr.mxu0 0.0
    %1476 = vmatpush1.msra.mxu0 %v1342
    %1477 = vmatprep.subr.mxu0 0.0
    %1478 = vmatpush1.msra.mxu0 %v1345
    %1479 = vmatprep.subr.mxu0 0.0
    %1480 = vmatpush1.msra.mxu0 %v1348
    %1481 = vmatprep.subr.mxu0 0.0
    %1482 = vmatpush1.msra.mxu0 %v1351
    %1483 = vmatprep.subr.mxu0 0.0
    %1484 = vmatpush1.msra.mxu0 %v1354
    %1485 = vmatprep.subr.mxu0 0.0
    %1486 = vmatpush1.msra.mxu0 %v1357
    %1487 = vmatprep.subr.mxu0 0.0
    %1488 = vmatpush1.msra.mxu0 %v1360
    %1489 = vmatprep.subr.mxu0 0.0
    %1490 = vmatpush1.msra.mxu0 %v1363
    %1491 = vmatprep.subr.mxu0 0.0
    %1492 = vmatpush1.msra.mxu0 %v1366
    %1493 = vmatprep.subr.mxu0 0.0
    %1494 = vmatpush1.msra.mxu0 %v1369
    %1495 = vmatprep.subr.mxu0 0.0
    %1496 = vmatpush1.msra.mxu0 %v1372
    %1497 = vmatprep.subr.mxu0 0.0
    %1498 = vmatpush1.msra.mxu0 %v1375
    %1499 = vmatprep.subr.mxu0 0.0
    %1500 = vmatpush1.msra.mxu0 %v1378
    %1501 = vmatprep.subr.mxu0 0.0
    %1502 = vmatpush1.msra.mxu0 %v1381
    %1503 = vmatprep.subr.mxu0 0.0
    %1504 = vmatpush1.msra.mxu0 0.0
    %1505 = vmatprep.subr.mxu0 0.0
    %1506 = vmatpush1.msra.mxu0 0.0
    %1507 = vmatprep.subr.mxu0 0.0
    %1508 = vmatpush1.msra.mxu0 0.0
    %1509 = vmatprep.subr.mxu0 0.0
    %1510 = vmatpush1.msra.mxu0 0.0
    %1511 = vmatprep.subr.mxu0 0.0
    %1512 = vmatpush1.msra.mxu0 0.0
    %1513 = vmatprep.subr.mxu0 0.0
    %1514 = vmatpush1.msra.mxu0 0.0
    %1515 = vmatprep.subr.mxu0 0.0
    %1516 = vmatpush1.msra.mxu0 0.0
    %1517 = vmatprep.subr.mxu0 0.0
    %1518 = vmatpush1.msra.mxu0 0.0
    %1519 = vmatprep.subr.mxu0 0.0
    %1520 = vmatpush1.msra.mxu0 0.0
    %1521 = vmatprep.subr.mxu0 0.0
    %1522 = vmatpush1.msra.mxu0 0.0
    %1523 = vmatprep.subr.mxu0 0.0
    %1524 = vmatpush1.msra.mxu0 0.0
    %1525 = vmatprep.subr.mxu0 0.0
    %1526 = vmatpush1.msra.mxu0 0.0
    %1527 = vmatprep.subr.mxu0 0.0
    %1528 = vmatpush1.msra.mxu0 0.0
    %1529 = vmatprep.subr.mxu0 0.0
    %1530 = vmatpush1.msra.mxu0 0.0
    %1531 = vmatprep.subr.mxu0 0.0
    %1532 = vmatpush1.msra.mxu0 0.0
    %1533 = vmatprep.subr.mxu0 0.0
    %1534 = vmatpush1.msra.mxu0 0.0
    %1535 = vmatprep.mubr.f32.mxu0 0.0
    %1536 = vmatmul.mubr.f32.gmra.mrb[0].mxu0 %v1390
    %v1537 = vpop.f32.mrb[0].mxu0
    %v1538 = vadd.f32 0.0, %v1537
    %v1539 = vpop.f32.mrb[0].mxu0
    %1540 = vdwg.mxu0
    %v1541 = vadd.f32 %v1397, %v1467
    %v1542 = vmul.f32 %v1541, 0.5
    %v1543 = vtanh.pop %v1542
    %v1544 = vmul.f32 %v1543, 0.5
    %v1545 = vadd.f32 %v1544, 0.5
    %v1546 = vadd.f32 %v1398, %v1469
    %v1547 = vmul.f32 %v1546, 0.5
    %v1548 = vtanh.pop %v1547
    %v1549 = vmul.f32 %v1548, 0.5
    %v1550 = vadd.f32 %v1549, 0.5
    %v1551 = vadd.f32 %v1538, %v1382
    %v1552 = vmul.f32 %v1545, %v1551
    %v1553 = vadd.f32 %v1399, %v1552
    %v1554 = vtanh.pop %v1553
    %v1555 = vsub.f32 1.0, %v1550
    %v1556 = vmul.f32 %v1555, %v1554
    %v1557 = vmul.f32 %v1550, %v1390
    %v1558 = vadd.f32 %v1556, %v1557
    %s1559 = scalar_lea.vmem [#allocation4], %s1391
    %1560 = vst [vmem:[%s1559] sm:$0xff] %v1558
  $region38: #{gru_model_forward.1} parent=0 // loop_footer
    %s1389 = sadd.s32 1, %s1385
  $region39: #{gru_model_forward.1} parent=0 // loop_footer_branch
    %1384 = sbr.rel target = $region35
  $region40: #{gru_model_forward.1} parent=0 // loop_exit
    _
  %1561 = vst [vmem:[#allocation2] sm:$0xff] %v1390
  %v1562 = vld [vmem:[#allocation4] sm:$0xff]
  %v1563 = vld [vmem:[#allocation4 + $0x8] sm:$0xff]
  %v1564 = vld [vmem:[#allocation4 + $0x10] sm:$0xff]
  %v1565 = vld [vmem:[#allocation4 + $0x18] sm:$0xff]
  %v1566 = vld [vmem:[#allocation4 + $0x20] sm:$0xff]
  %v1567 = vld [vmem:[#allocation4 + $0x28] sm:$0xff]
  %v1568 = vld [vmem:[#allocation4 + $0x30] sm:$0xff]
  %v1569 = vld [vmem:[#allocation4 + $0x38] sm:$0xff]
  %v1570 = vld [vmem:[#allocation4 + $0x40] sm:$0xff]
  %v1571 = vld [vmem:[#allocation4 + $0x48] sm:$0xff]
  %v1572 = vld [vmem:[#allocation4 + $0x50] sm:$0xff]
  %v1573 = vld [vmem:[#allocation4 + $0x58] sm:$0xff]
  %v1574 = vld [vmem:[#allocation4 + $0x60] sm:$0xff]
  %v1575 = vld [vmem:[#allocation4 + $0x68] sm:$0xff]
  %v1576 = vld [vmem:[#allocation4 + $0x70] sm:$0xff]
  %v1577 = vld [vmem:[#allocation4 + $0x78] sm:$0xff]
  %v1578 = vld [vmem:[#allocation4 + $0x80] sm:$0xff]
  %v1579 = vld [vmem:[#allocation4 + $0x88] sm:$0xff]
  %v1580 = vld [vmem:[#allocation4 + $0x90] sm:$0xff]
  %v1581 = vld [vmem:[#allocation4 + $0x98] sm:$0xff]
  %v1582 = vld [vmem:[#allocation4 + $0xa0] sm:$0xff]
  %v1583 = vld [vmem:[#allocation4 + $0xa8] sm:$0xff]
  %v1584 = vld [vmem:[#allocation4 + $0xb0] sm:$0xff]
  %v1585 = vld [vmem:[#allocation4 + $0xb8] sm:$0xff]
  %v1586 = vld [vmem:[#allocation4 + $0xc0] sm:$0xff]
  %v1587 = vld [vmem:[#allocation4 + $0xc8] sm:$0xff]
  %v1588 = vld [vmem:[#allocation4 + $0xd0] sm:$0xff]
  %v1589 = vld [vmem:[#allocation4 + $0xd8] sm:$0xff]
  %v1590 = vld [vmem:[#allocation4 + $0xe0] sm:$0xff]
  %v1591 = vld [vmem:[#allocation4 + $0xe8] sm:$0xff]
  %v1592 = vld [vmem:[#allocation4 + $0xf0] sm:$0xff]
  %v1593 = vld [vmem:[#allocation4 + $0xf8] sm:$0xff]
  %v1594 = vld [vmem:[#allocation4 + $0x100] sm:$0xff]
  %v1595 = vld [vmem:[#allocation4 + $0x108] sm:$0xff]
  %v1596 = vld [vmem:[#allocation4 + $0x110] sm:$0xff]
  %v1597 = vld [vmem:[#allocation4 + $0x118] sm:$0xff]
  %v1598 = vld [vmem:[#allocation4 + $0x120] sm:$0xff]
  %v1599 = vld [vmem:[#allocation4 + $0x128] sm:$0xff]
  %v1600 = vld [vmem:[#allocation4 + $0x130] sm:$0xff]
  %v1601 = vld [vmem:[#allocation4 + $0x138] sm:$0xff]
  %v1602 = vld [vmem:[#allocation4 + $0x140] sm:$0xff]
  %v1603 = vld [vmem:[#allocation4 + $0x148] sm:$0xff]
  %v1604 = vld [vmem:[#allocation4 + $0x150] sm:$0xff]
  %v1605 = vld [vmem:[#allocation4 + $0x158] sm:$0xff]
  %v1606 = vld [vmem:[#allocation4 + $0x160] sm:$0xff]
  %v1607 = vld [vmem:[#allocation4 + $0x168] sm:$0xff]
  %v1608 = vld [vmem:[#allocation4 + $0x170] sm:$0xff]
  %v1609 = vld [vmem:[#allocation4 + $0x178] sm:$0xff]
  %v1610 = vld [vmem:[#allocation4 + $0x180] sm:$0xff]
  %v1611 = vld [vmem:[#allocation4 + $0x188] sm:$0xff]
  %v1612 = vld [vmem:[#allocation4 + $0x190] sm:$0xff]
  %v1613 = vld [vmem:[#allocation4 + $0x198] sm:$0xff]
  %v1614 = vld [vmem:[#allocation4 + $0x1a0] sm:$0xff]
  %v1615 = vld [vmem:[#allocation4 + $0x1a8] sm:$0xff]
  %v1616 = vld [vmem:[#allocation4 + $0x1b0] sm:$0xff]
  %v1617 = vld [vmem:[#allocation4 + $0x1b8] sm:$0xff]
  %v1618 = vld [vmem:[#allocation4 + $0x1c0] sm:$0xff]
  %v1619 = vld [vmem:[#allocation4 + $0x1c8] sm:$0xff]
  %v1620 = vld [vmem:[#allocation4 + $0x1d0] sm:$0xff]
  %v1621 = vld [vmem:[#allocation4 + $0x1d8] sm:$0xff]
  %v1622 = vld [vmem:[#allocation4 + $0x1e0] sm:$0xff]
  %v1623 = vld [vmem:[#allocation4 + $0x1e8] sm:$0xff]
  %v1624 = vld [vmem:[#allocation4 + $0x1f0] sm:$0xff]
  %v1625 = vld [vmem:[#allocation4 + $0x1f8] sm:$0xff]
  %v1626 = vld [vmem:[%s5] sm:$0xff]
  %v1627 = vld [vmem:[%s5 + $0x8] sm:$0xff]
  %v1628 = vld [vmem:[%s5 + $0x10] sm:$0xff]
  %v1629 = vld [vmem:[%s5 + $0x18] sm:$0xff]
  %v1630 = vld [vmem:[%s5 + $0x20] sm:$0xff]
  %v1631 = vld [vmem:[%s5 + $0x28] sm:$0xff]
  %v1632 = vld [vmem:[%s5 + $0x30] sm:$0xff]
  %v1633 = vld [vmem:[%s5 + $0x38] sm:$0xff]
  %v1634 = vld [vmem:[%s5 + $0x40] sm:$0xff]
  %v1635 = vld [vmem:[%s5 + $0x48] sm:$0xff]
  %v1636 = vld [vmem:[%s5 + $0x50] sm:$0xff]
  %v1637 = vld [vmem:[%s5 + $0x58] sm:$0xff]
  %v1638 = vld [vmem:[%s5 + $0x60] sm:$0xff]
  %v1639 = vld [vmem:[%s5 + $0x68] sm:$0xff]
  %v1640 = vld [vmem:[%s5 + $0x70] sm:$0xff]
  %v1641 = vld [vmem:[%s5 + $0x78] sm:$0xff]
  %v1642 = vld [vmem:[%s6] sm:$0x1]
  %v1644 = vlaneseq
  %v1645 = vshrl.u32 %v1644, 7
  %v1646 = vsub.s32 0, %v1645
  %v1647 = vrot.slane %v1642, %v1646
  %1649 = vmatprep.subr.mxu0 0.0
  %1650 = vmatpush1.msra.mxu0 %v1626
  %1651 = vmatprep.subr.mxu0 0.0
  %1652 = vmatpush1.msra.mxu0 %v1627
  %1653 = vmatprep.subr.mxu0 0.0
  %1654 = vmatpush1.msra.mxu0 %v1628
  %1655 = vmatprep.subr.mxu0 0.0
  %1656 = vmatpush1.msra.mxu0 %v1629
  %1657 = vmatprep.subr.mxu0 0.0
  %1658 = vmatpush1.msra.mxu0 %v1630
  %1659 = vmatprep.subr.mxu0 0.0
  %1660 = vmatpush1.msra.mxu0 %v1631
  %1661 = vmatprep.subr.mxu0 0.0
  %1662 = vmatpush1.msra.mxu0 %v1632
  %1663 = vmatprep.subr.mxu0 0.0
  %1664 = vmatpush1.msra.mxu0 %v1633
  %1665 = vmatprep.subr.mxu0 0.0
  %1666 = vmatpush1.msra.mxu0 %v1634
  %1667 = vmatprep.subr.mxu0 0.0
  %1668 = vmatpush1.msra.mxu0 %v1635
  %1669 = vmatprep.subr.mxu0 0.0
  %1670 = vmatpush1.msra.mxu0 %v1636
  %1671 = vmatprep.subr.mxu0 0.0
  %1672 = vmatpush1.msra.mxu0 %v1637
  %1673 = vmatprep.subr.mxu0 0.0
  %1674 = vmatpush1.msra.mxu0 %v1638
  %1675 = vmatprep.subr.mxu0 0.0
  %1676 = vmatpush1.msra.mxu0 %v1639
  %1677 = vmatprep.subr.mxu0 0.0
  %1678 = vmatpush1.msra.mxu0 %v1640
  %1679 = vmatprep.subr.mxu0 0.0
  %1680 = vmatpush1.msra.mxu0 %v1641
  %1681 = vmatprep.subr.mxu0 0.0
  %1682 = vmatpush1.msra.mxu0 0.0
  %1683 = vmatprep.subr.mxu0 0.0
  %1684 = vmatpush1.msra.mxu0 0.0
  %1685 = vmatprep.subr.mxu0 0.0
  %1686 = vmatpush1.msra.mxu0 0.0
  %1687 = vmatprep.subr.mxu0 0.0
  %1688 = vmatpush1.msra.mxu0 0.0
  %1689 = vmatprep.subr.mxu0 0.0
  %1690 = vmatpush1.msra.mxu0 0.0
  %1691 = vmatprep.subr.mxu0 0.0
  %1692 = vmatpush1.msra.mxu0 0.0
  %1693 = vmatprep.subr.mxu0 0.0
  %1694 = vmatpush1.msra.mxu0 0.0
  %1695 = vmatprep.subr.mxu0 0.0
  %1696 = vmatpush1.msra.mxu0 0.0
  %1697 = vmatprep.subr.mxu0 0.0
  %1698 = vmatpush1.msra.mxu0 0.0
  %1699 = vmatprep.subr.mxu0 0.0
  %1700 = vmatpush1.msra.mxu0 0.0
  %1701 = vmatprep.subr.mxu0 0.0
  %1702 = vmatpush1.msra.mxu0 0.0
  %1703 = vmatprep.subr.mxu0 0.0
  %1704 = vmatpush1.msra.mxu0 0.0
  %1705 = vmatprep.subr.mxu0 0.0
  %1706 = vmatpush1.msra.mxu0 0.0
  %1707 = vmatprep.subr.mxu0 0.0
  %1708 = vmatpush1.msra.mxu0 0.0
  %1709 = vmatprep.subr.mxu0 0.0
  %1710 = vmatpush1.msra.mxu0 0.0
  %1711 = vmatprep.subr.mxu0 0.0
  %1712 = vmatpush1.msra.mxu0 0.0
  %1713 = vmatprep.mubr.f32.mxu0 0.0
  %1714 = vmatmul.mubr.f32.gmra.mrb[0].mxu0 %v1562
  %v1715 = vpop.f32.mrb[0].mxu0
  %v1716 = vadd.f32 %v1647, %v1715
  %v1717 = vpop.f32.mrb[0].mxu0
  %1718 = vmatprep.mubr.f32.mxu0 0.0
  %1719 = vmatmul.mubr.f32.gmra.mrb[0].mxu0 %v1563
  %v1720 = vpop.f32.mrb[0].mxu0
  %v1721 = vadd.f32 %v1647, %v1720
  %v1722 = vpop.f32.mrb[0].mxu0
  %1723 = vmatprep.mubr.f32.mxu0 0.0
  %1724 = vmatmul.mubr.f32.gmra.mrb[0].mxu0 %v1564
  %v1725 = vpop.f32.mrb[0].mxu0
  %v1726 = vadd.f32 %v1647, %v1725
  %v1727 = vpop.f32.mrb[0].mxu0
  %1728 = vmatprep.mubr.f32.mxu0 0.0
  %1729 = vmatmul.mubr.f32.gmra.mrb[0].mxu0 %v1565
  %v1730 = vpop.f32.mrb[0].mxu0
  %v1731 = vadd.f32 %v1647, %v1730
  %v1732 = vpop.f32.mrb[0].mxu0
  %1733 = vmatprep.mubr.f32.mxu0 0.0
  %1734 = vmatmul.mubr.f32.gmra.mrb[0].mxu0 %v1566
  %v1735 = vpop.f32.mrb[0].mxu0
  %v1736 = vadd.f32 %v1647, %v1735
  %v1737 = vpop.f32.mrb[0].mxu0
  %1738 = vmatprep.mubr.f32.mxu0 0.0
  %1739 = vmatmul.mubr.f32.gmra.mrb[0].mxu0 %v1567
  %v1740 = vpop.f32.mrb[0].mxu0
  %v1741 = vadd.f32 %v1647, %v1740
  %v1742 = vpop.f32.mrb[0].mxu0
  %1743 = vmatprep.mubr.f32.mxu0 0.0
  %1744 = vmatmul.mubr.f32.gmra.mrb[0].mxu0 %v1568
  %v1745 = vpop.f32.mrb[0].mxu0
  %v1746 = vadd.f32 %v1647, %v1745
  %v1747 = vpop.f32.mrb[0].mxu0
  %1748 = vmatprep.mubr.f32.mxu0 0.0
  %1749 = vmatmul.mubr.f32.gmra.mrb[0].mxu0 %v1569
  %v1750 = vpop.f32.mrb[0].mxu0
  %v1751 = vadd.f32 %v1647, %v1750
  %v1752 = vpop.f32.mrb[0].mxu0
  %1753 = vmatprep.mubr.f32.mxu0 0.0
  %1754 = vmatmul.mubr.f32.gmra.mrb[0].mxu0 %v1570
  %v1755 = vpop.f32.mrb[0].mxu0
  %v1756 = vadd.f32 %v1647, %v1755
  %v1757 = vpop.f32.mrb[0].mxu0
  %1758 = vmatprep.mubr.f32.mxu0 0.0
  %1759 = vmatmul.mubr.f32.gmra.mrb[0].mxu0 %v1571
  %v1760 = vpop.f32.mrb[0].mxu0
  %v1761 = vadd.f32 %v1647, %v1760
  %v1762 = vpop.f32.mrb[0].mxu0
  %1763 = vmatprep.mubr.f32.mxu0 0.0
  %1764 = vmatmul.mubr.f32.gmra.mrb[0].mxu0 %v1572
  %v1765 = vpop.f32.mrb[0].mxu0
  %v1766 = vadd.f32 %v1647, %v1765
  %v1767 = vpop.f32.mrb[0].mxu0
  %1768 = vmatprep.mubr.f32.mxu0 0.0
  %1769 = vmatmul.mubr.f32.gmra.mrb[0].mxu0 %v1573
  %v1770 = vpop.f32.mrb[0].mxu0
  %v1771 = vadd.f32 %v1647, %v1770
  %v1772 = vpop.f32.mrb[0].mxu0
  %1773 = vmatprep.mubr.f32.mxu0 0.0
  %1774 = vmatmul.mubr.f32.gmra.mrb[0].mxu0 %v1574
  %v1775 = vpop.f32.mrb[0].mxu0
  %v1776 = vadd.f32 %v1647, %v1775
  %v1777 = vpop.f32.mrb[0].mxu0
  %1778 = vmatprep.mubr.f32.mxu0 0.0
  %1779 = vmatmul.mubr.f32.gmra.mrb[0].mxu0 %v1575
  %v1780 = vpop.f32.mrb[0].mxu0
  %v1781 = vadd.f32 %v1647, %v1780
  %v1782 = vpop.f32.mrb[0].mxu0
  %1783 = vmatprep.mubr.f32.mxu0 0.0
  %1784 = vmatmul.mubr.f32.gmra.mrb[0].mxu0 %v1576
  %v1785 = vpop.f32.mrb[0].mxu0
  %v1786 = vadd.f32 %v1647, %v1785
  %v1787 = vpop.f32.mrb[0].mxu0
  %1788 = vmatprep.mubr.f32.mxu0 0.0
  %1789 = vmatmul.mubr.f32.gmra.mrb[0].mxu0 %v1577
  %v1790 = vpop.f32.mrb[0].mxu0
  %v1791 = vadd.f32 %v1647, %v1790
  %v1792 = vpop.f32.mrb[0].mxu0
  %1793 = vmatprep.mubr.f32.mxu0 0.0
  %1794 = vmatmul.mubr.f32.gmra.mrb[0].mxu0 %v1578
  %v1795 = vpop.f32.mrb[0].mxu0
  %v1796 = vadd.f32 %v1647, %v1795
  %v1797 = vpop.f32.mrb[0].mxu0
  %1798 = vmatprep.mubr.f32.mxu0 0.0
  %1799 = vmatmul.mubr.f32.gmra.mrb[0].mxu0 %v1579
  %v1800 = vpop.f32.mrb[0].mxu0
  %v1801 = vadd.f32 %v1647, %v1800
  %v1802 = vpop.f32.mrb[0].mxu0
  %1803 = vmatprep.mubr.f32.mxu0 0.0
  %1804 = vmatmul.mubr.f32.gmra.mrb[0].mxu0 %v1580
  %v1805 = vpop.f32.mrb[0].mxu0
  %v1806 = vadd.f32 %v1647, %v1805
  %v1807 = vpop.f32.mrb[0].mxu0
  %1808 = vmatprep.mubr.f32.mxu0 0.0
  %1809 = vmatmul.mubr.f32.gmra.mrb[0].mxu0 %v1581
  %v1810 = vpop.f32.mrb[0].mxu0
  %v1811 = vadd.f32 %v1647, %v1810
  %v1812 = vpop.f32.mrb[0].mxu0
  %1813 = vmatprep.mubr.f32.mxu0 0.0
  %1814 = vmatmul.mubr.f32.gmra.mrb[0].mxu0 %v1582
  %v1815 = vpop.f32.mrb[0].mxu0
  %v1816 = vadd.f32 %v1647, %v1815
  %v1817 = vpop.f32.mrb[0].mxu0
  %1818 = vmatprep.mubr.f32.mxu0 0.0
  %1819 = vmatmul.mubr.f32.gmra.mrb[0].mxu0 %v1583
  %v1820 = vpop.f32.mrb[0].mxu0
  %v1821 = vadd.f32 %v1647, %v1820
  %v1822 = vpop.f32.mrb[0].mxu0
  %1823 = vmatprep.mubr.f32.mxu0 0.0
  %1824 = vmatmul.mubr.f32.gmra.mrb[0].mxu0 %v1584
  %v1825 = vpop.f32.mrb[0].mxu0
  %v1826 = vadd.f32 %v1647, %v1825
  %v1827 = vpop.f32.mrb[0].mxu0
  %1828 = vmatprep.mubr.f32.mxu0 0.0
  %1829 = vmatmul.mubr.f32.gmra.mrb[0].mxu0 %v1585
  %v1830 = vpop.f32.mrb[0].mxu0
  %v1831 = vadd.f32 %v1647, %v1830
  %v1832 = vpop.f32.mrb[0].mxu0
  %1833 = vmatprep.mubr.f32.mxu0 0.0
  %1834 = vmatmul.mubr.f32.gmra.mrb[0].mxu0 %v1586
  %v1835 = vpop.f32.mrb[0].mxu0
  %v1836 = vadd.f32 %v1647, %v1835
  %v1837 = vpop.f32.mrb[0].mxu0
  %1838 = vmatprep.mubr.f32.mxu0 0.0
  %1839 = vmatmul.mubr.f32.gmra.mrb[0].mxu0 %v1587
  %v1840 = vpop.f32.mrb[0].mxu0
  %v1841 = vadd.f32 %v1647, %v1840
  %v1842 = vpop.f32.mrb[0].mxu0
  %1843 = vmatprep.mubr.f32.mxu0 0.0
  %1844 = vmatmul.mubr.f32.gmra.mrb[0].mxu0 %v1588
  %v1845 = vpop.f32.mrb[0].mxu0
  %v1846 = vadd.f32 %v1647, %v1845
  %v1847 = vpop.f32.mrb[0].mxu0
  %1848 = vmatprep.mubr.f32.mxu0 0.0
  %1849 = vmatmul.mubr.f32.gmra.mrb[0].mxu0 %v1589
  %v1850 = vpop.f32.mrb[0].mxu0
  %v1851 = vadd.f32 %v1647, %v1850
  %v1852 = vpop.f32.mrb[0].mxu0
  %1853 = vmatprep.mubr.f32.mxu0 0.0
  %1854 = vmatmul.mubr.f32.gmra.mrb[0].mxu0 %v1590
  %v1855 = vpop.f32.mrb[0].mxu0
  %v1856 = vadd.f32 %v1647, %v1855
  %v1857 = vpop.f32.mrb[0].mxu0
  %1858 = vmatprep.mubr.f32.mxu0 0.0
  %1859 = vmatmul.mubr.f32.gmra.mrb[0].mxu0 %v1591
  %v1860 = vpop.f32.mrb[0].mxu0
  %v1861 = vadd.f32 %v1647, %v1860
  %v1862 = vpop.f32.mrb[0].mxu0
  %1863 = vmatprep.mubr.f32.mxu0 0.0
  %1864 = vmatmul.mubr.f32.gmra.mrb[0].mxu0 %v1592
  %v1865 = vpop.f32.mrb[0].mxu0
  %v1866 = vadd.f32 %v1647, %v1865
  %v1867 = vpop.f32.mrb[0].mxu0
  %1868 = vmatprep.mubr.f32.mxu0 0.0
  %1869 = vmatmul.mubr.f32.gmra.mrb[0].mxu0 %v1593
  %v1870 = vpop.f32.mrb[0].mxu0
  %v1871 = vadd.f32 %v1647, %v1870
  %v1872 = vpop.f32.mrb[0].mxu0
  %1873 = vmatprep.mubr.f32.mxu0 0.0
  %1874 = vmatmul.mubr.f32.gmra.mrb[0].mxu0 %v1594
  %v1875 = vpop.f32.mrb[0].mxu0
  %v1876 = vadd.f32 %v1647, %v1875
  %v1877 = vpop.f32.mrb[0].mxu0
  %1878 = vmatprep.mubr.f32.mxu0 0.0
  %1879 = vmatmul.mubr.f32.gmra.mrb[0].mxu0 %v1595
  %v1880 = vpop.f32.mrb[0].mxu0
  %v1881 = vadd.f32 %v1647, %v1880
  %v1882 = vpop.f32.mrb[0].mxu0
  %1883 = vmatprep.mubr.f32.mxu0 0.0
  %1884 = vmatmul.mubr.f32.gmra.mrb[0].mxu0 %v1596
  %v1885 = vpop.f32.mrb[0].mxu0
  %v1886 = vadd.f32 %v1647, %v1885
  %v1887 = vpop.f32.mrb[0].mxu0
  %1888 = vmatprep.mubr.f32.mxu0 0.0
  %1889 = vmatmul.mubr.f32.gmra.mrb[0].mxu0 %v1597
  %v1890 = vpop.f32.mrb[0].mxu0
  %v1891 = vadd.f32 %v1647, %v1890
  %v1892 = vpop.f32.mrb[0].mxu0
  %1893 = vmatprep.mubr.f32.mxu0 0.0
  %1894 = vmatmul.mubr.f32.gmra.mrb[0].mxu0 %v1598
  %v1895 = vpop.f32.mrb[0].mxu0
  %v1896 = vadd.f32 %v1647, %v1895
  %v1897 = vpop.f32.mrb[0].mxu0
  %1898 = vmatprep.mubr.f32.mxu0 0.0
  %1899 = vmatmul.mubr.f32.gmra.mrb[0].mxu0 %v1599
  %v1900 = vpop.f32.mrb[0].mxu0
  %v1901 = vadd.f32 %v1647, %v1900
  %v1902 = vpop.f32.mrb[0].mxu0
  %1903 = vmatprep.mubr.f32.mxu0 0.0
  %1904 = vmatmul.mubr.f32.gmra.mrb[0].mxu0 %v1600
  %v1905 = vpop.f32.mrb[0].mxu0
  %v1906 = vadd.f32 %v1647, %v1905
  %v1907 = vpop.f32.mrb[0].mxu0
  %1908 = vmatprep.mubr.f32.mxu0 0.0
  %1909 = vmatmul.mubr.f32.gmra.mrb[0].mxu0 %v1601
  %v1910 = vpop.f32.mrb[0].mxu0
  %v1911 = vadd.f32 %v1647, %v1910
  %v1912 = vpop.f32.mrb[0].mxu0
  %1913 = vmatprep.mubr.f32.mxu0 0.0
  %1914 = vmatmul.mubr.f32.gmra.mrb[0].mxu0 %v1602
  %v1915 = vpop.f32.mrb[0].mxu0
  %v1916 = vadd.f32 %v1647, %v1915
  %v1917 = vpop.f32.mrb[0].mxu0
  %1918 = vmatprep.mubr.f32.mxu0 0.0
  %1919 = vmatmul.mubr.f32.gmra.mrb[0].mxu0 %v1603
  %v1920 = vpop.f32.mrb[0].mxu0
  %v1921 = vadd.f32 %v1647, %v1920
  %v1922 = vpop.f32.mrb[0].mxu0
  %1923 = vmatprep.mubr.f32.mxu0 0.0
  %1924 = vmatmul.mubr.f32.gmra.mrb[0].mxu0 %v1604
  %v1925 = vpop.f32.mrb[0].mxu0
  %v1926 = vadd.f32 %v1647, %v1925
  %v1927 = vpop.f32.mrb[0].mxu0
  %1928 = vmatprep.mubr.f32.mxu0 0.0
  %1929 = vmatmul.mubr.f32.gmra.mrb[0].mxu0 %v1605
  %v1930 = vpop.f32.mrb[0].mxu0
  %v1931 = vadd.f32 %v1647, %v1930
  %v1932 = vpop.f32.mrb[0].mxu0
  %1933 = vmatprep.mubr.f32.mxu0 0.0
  %1934 = vmatmul.mubr.f32.gmra.mrb[0].mxu0 %v1606
  %v1935 = vpop.f32.mrb[0].mxu0
  %v1936 = vadd.f32 %v1647, %v1935
  %v1937 = vpop.f32.mrb[0].mxu0
  %1938 = vmatprep.mubr.f32.mxu0 0.0
  %1939 = vmatmul.mubr.f32.gmra.mrb[0].mxu0 %v1607
  %v1940 = vpop.f32.mrb[0].mxu0
  %v1941 = vadd.f32 %v1647, %v1940
  %v1942 = vpop.f32.mrb[0].mxu0
  %1943 = vmatprep.mubr.f32.mxu0 0.0
  %1944 = vmatmul.mubr.f32.gmra.mrb[0].mxu0 %v1608
  %v1945 = vpop.f32.mrb[0].mxu0
  %v1946 = vadd.f32 %v1647, %v1945
  %v1947 = vpop.f32.mrb[0].mxu0
  %1948 = vmatprep.mubr.f32.mxu0 0.0
  %1949 = vmatmul.mubr.f32.gmra.mrb[0].mxu0 %v1609
  %v1950 = vpop.f32.mrb[0].mxu0
  %v1951 = vadd.f32 %v1647, %v1950
  %v1952 = vpop.f32.mrb[0].mxu0
  %1953 = vmatprep.mubr.f32.mxu0 0.0
  %1954 = vmatmul.mubr.f32.gmra.mrb[0].mxu0 %v1610
  %v1955 = vpop.f32.mrb[0].mxu0
  %v1956 = vadd.f32 %v1647, %v1955
  %v1957 = vpop.f32.mrb[0].mxu0
  %1958 = vmatprep.mubr.f32.mxu0 0.0
  %1959 = vmatmul.mubr.f32.gmra.mrb[0].mxu0 %v1611
  %v1960 = vpop.f32.mrb[0].mxu0
  %v1961 = vadd.f32 %v1647, %v1960
  %v1962 = vpop.f32.mrb[0].mxu0
  %1963 = vmatprep.mubr.f32.mxu0 0.0
  %1964 = vmatmul.mubr.f32.gmra.mrb[0].mxu0 %v1612
  %v1965 = vpop.f32.mrb[0].mxu0
  %v1966 = vadd.f32 %v1647, %v1965
  %v1967 = vpop.f32.mrb[0].mxu0
  %1968 = vmatprep.mubr.f32.mxu0 0.0
  %1969 = vmatmul.mubr.f32.gmra.mrb[0].mxu0 %v1613
  %v1970 = vpop.f32.mrb[0].mxu0
  %v1971 = vadd.f32 %v1647, %v1970
  %v1972 = vpop.f32.mrb[0].mxu0
  %1973 = vmatprep.mubr.f32.mxu0 0.0
  %1974 = vmatmul.mubr.f32.gmra.mrb[0].mxu0 %v1614
  %v1975 = vpop.f32.mrb[0].mxu0
  %v1976 = vadd.f32 %v1647, %v1975
  %v1977 = vpop.f32.mrb[0].mxu0
  %1978 = vmatprep.mubr.f32.mxu0 0.0
  %1979 = vmatmul.mubr.f32.gmra.mrb[0].mxu0 %v1615
  %v1980 = vpop.f32.mrb[0].mxu0
  %v1981 = vadd.f32 %v1647, %v1980
  %v1982 = vpop.f32.mrb[0].mxu0
  %1983 = vmatprep.mubr.f32.mxu0 0.0
  %1984 = vmatmul.mubr.f32.gmra.mrb[0].mxu0 %v1616
  %v1985 = vpop.f32.mrb[0].mxu0
  %v1986 = vadd.f32 %v1647, %v1985
  %v1987 = vpop.f32.mrb[0].mxu0
  %1988 = vmatprep.mubr.f32.mxu0 0.0
  %1989 = vmatmul.mubr.f32.gmra.mrb[0].mxu0 %v1617
  %v1990 = vpop.f32.mrb[0].mxu0
  %v1991 = vadd.f32 %v1647, %v1990
  %v1992 = vpop.f32.mrb[0].mxu0
  %1993 = vmatprep.mubr.f32.mxu0 0.0
  %1994 = vmatmul.mubr.f32.gmra.mrb[0].mxu0 %v1618
  %v1995 = vpop.f32.mrb[0].mxu0
  %v1996 = vadd.f32 %v1647, %v1995
  %v1997 = vpop.f32.mrb[0].mxu0
  %1998 = vmatprep.mubr.f32.mxu0 0.0
  %1999 = vmatmul.mubr.f32.gmra.mrb[0].mxu0 %v1619
  %v2000 = vpop.f32.mrb[0].mxu0
  %v2001 = vadd.f32 %v1647, %v2000
  %v2002 = vpop.f32.mrb[0].mxu0
  %2003 = vmatprep.mubr.f32.mxu0 0.0
  %2004 = vmatmul.mubr.f32.gmra.mrb[0].mxu0 %v1620
  %v2005 = vpop.f32.mrb[0].mxu0
  %v2006 = vadd.f32 %v1647, %v2005
  %v2007 = vpop.f32.mrb[0].mxu0
  %2008 = vmatprep.mubr.f32.mxu0 0.0
  %2009 = vmatmul.mubr.f32.gmra.mrb[0].mxu0 %v1621
  %v2010 = vpop.f32.mrb[0].mxu0
  %v2011 = vadd.f32 %v1647, %v2010
  %v2012 = vpop.f32.mrb[0].mxu0
  %2013 = vmatprep.mubr.f32.mxu0 0.0
  %2014 = vmatmul.mubr.f32.gmra.mrb[0].mxu0 %v1622
  %v2015 = vpop.f32.mrb[0].mxu0
  %v2016 = vadd.f32 %v1647, %v2015
  %v2017 = vpop.f32.mrb[0].mxu0
  %2018 = vmatprep.mubr.f32.mxu0 0.0
  %2019 = vmatmul.mubr.f32.gmra.mrb[0].mxu0 %v1623
  %v2020 = vpop.f32.mrb[0].mxu0
  %v2021 = vadd.f32 %v1647, %v2020
  %v2022 = vpop.f32.mrb[0].mxu0
  %2023 = vmatprep.mubr.f32.mxu0 0.0
  %2024 = vmatmul.mubr.f32.gmra.mrb[0].mxu0 %v1624
  %v2025 = vpop.f32.mrb[0].mxu0
  %v2026 = vadd.f32 %v1647, %v2025
  %v2027 = vpop.f32.mrb[0].mxu0
  %2028 = vmatprep.mubr.f32.mxu0 0.0
  %2029 = vmatmul.mubr.f32.gmra.mrb[0].mxu0 %v1625
  %v2030 = vpop.f32.mrb[0].mxu0
  %v2031 = vadd.f32 %v1647, %v2030
  %v2032 = vpop.f32.mrb[0].mxu0
  %2033 = vdwg.mxu0
  %2034 = vst [vmem:[%s7] sm:$0xff] %v1716
  %2035 = vst [vmem:[%s7 + $0x8] sm:$0xff] %v1721
  %2036 = vst [vmem:[%s7 + $0x10] sm:$0xff] %v1726
  %2037 = vst [vmem:[%s7 + $0x18] sm:$0xff] %v1731
  %2038 = vst [vmem:[%s7 + $0x20] sm:$0xff] %v1736
  %2039 = vst [vmem:[%s7 + $0x28] sm:$0xff] %v1741
  %2040 = vst [vmem:[%s7 + $0x30] sm:$0xff] %v1746
  %2041 = vst [vmem:[%s7 + $0x38] sm:$0xff] %v1751
  %2042 = vst [vmem:[%s7 + $0x40] sm:$0xff] %v1756
  %2043 = vst [vmem:[%s7 + $0x48] sm:$0xff] %v1761
  %2044 = vst [vmem:[%s7 + $0x50] sm:$0xff] %v1766
  %2045 = vst [vmem:[%s7 + $0x58] sm:$0xff] %v1771
  %2046 = vst [vmem:[%s7 + $0x60] sm:$0xff] %v1776
  %2047 = vst [vmem:[%s7 + $0x68] sm:$0xff] %v1781
  %2048 = vst [vmem:[%s7 + $0x70] sm:$0xff] %v1786
  %2049 = vst [vmem:[%s7 + $0x78] sm:$0xff] %v1791
  %2050 = vst [vmem:[%s7 + $0x80] sm:$0xff] %v1796
  %2051 = vst [vmem:[%s7 + $0x88] sm:$0xff] %v1801
  %2052 = vst [vmem:[%s7 + $0x90] sm:$0xff] %v1806
  %2053 = vst [vmem:[%s7 + $0x98] sm:$0xff] %v1811
  %2054 = vst [vmem:[%s7 + $0xa0] sm:$0xff] %v1816
  %2055 = vst [vmem:[%s7 + $0xa8] sm:$0xff] %v1821
  %2056 = vst [vmem:[%s7 + $0xb0] sm:$0xff] %v1826
  %2057 = vst [vmem:[%s7 + $0xb8] sm:$0xff] %v1831
  %2058 = vst [vmem:[%s7 + $0xc0] sm:$0xff] %v1836
  %2059 = vst [vmem:[%s7 + $0xc8] sm:$0xff] %v1841
  %2060 = vst [vmem:[%s7 + $0xd0] sm:$0xff] %v1846
  %2061 = vst [vmem:[%s7 + $0xd8] sm:$0xff] %v1851
  %2062 = vst [vmem:[%s7 + $0xe0] sm:$0xff] %v1856
  %2063 = vst [vmem:[%s7 + $0xe8] sm:$0xff] %v1861
  %2064 = vst [vmem:[%s7 + $0xf0] sm:$0xff] %v1866
  %2065 = vst [vmem:[%s7 + $0xf8] sm:$0xff] %v1871
  %2066 = vst [vmem:[%s7 + $0x100] sm:$0xff] %v1876
  %2067 = vst [vmem:[%s7 + $0x108] sm:$0xff] %v1881
  %2068 = vst [vmem:[%s7 + $0x110] sm:$0xff] %v1886
  %2069 = vst [vmem:[%s7 + $0x118] sm:$0xff] %v1891
  %2070 = vst [vmem:[%s7 + $0x120] sm:$0xff] %v1896
  %2071 = vst [vmem:[%s7 + $0x128] sm:$0xff] %v1901
  %2072 = vst [vmem:[%s7 + $0x130] sm:$0xff] %v1906
  %2073 = vst [vmem:[%s7 + $0x138] sm:$0xff] %v1911
  %2074 = vst [vmem:[%s7 + $0x140] sm:$0xff] %v1916
  %2075 = vst [vmem:[%s7 + $0x148] sm:$0xff] %v1921
  %2076 = vst [vmem:[%s7 + $0x150] sm:$0xff] %v1926
  %2077 = vst [vmem:[%s7 + $0x158] sm:$0xff] %v1931
  %2078 = vst [vmem:[%s7 + $0x160] sm:$0xff] %v1936
  %2079 = vst [vmem:[%s7 + $0x168] sm:$0xff] %v1941
  %2080 = vst [vmem:[%s7 + $0x170] sm:$0xff] %v1946
  %2081 = vst [vmem:[%s7 + $0x178] sm:$0xff] %v1951
  %2082 = vst [vmem:[%s7 + $0x180] sm:$0xff] %v1956
  %2083 = vst [vmem:[%s7 + $0x188] sm:$0xff] %v1961
  %2084 = vst [vmem:[%s7 + $0x190] sm:$0xff] %v1966
  %2085 = vst [vmem:[%s7 + $0x198] sm:$0xff] %v1971
  %2086 = vst [vmem:[%s7 + $0x1a0] sm:$0xff] %v1976
  %2087 = vst [vmem:[%s7 + $0x1a8] sm:$0xff] %v1981
  %2088 = vst [vmem:[%s7 + $0x1b0] sm:$0xff] %v1986
  %2089 = vst [vmem:[%s7 + $0x1b8] sm:$0xff] %v1991
  %2090 = vst [vmem:[%s7 + $0x1c0] sm:$0xff] %v1996
  %2091 = vst [vmem:[%s7 + $0x1c8] sm:$0xff] %v2001
  %2092 = vst [vmem:[%s7 + $0x1d0] sm:$0xff] %v2006
  %2093 = vst [vmem:[%s7 + $0x1d8] sm:$0xff] %v2011
  %2094 = vst [vmem:[%s7 + $0x1e0] sm:$0xff] %v2016
  %2095 = vst [vmem:[%s7 + $0x1e8] sm:$0xff] %v2021
  %2096 = vst [vmem:[%s7 + $0x1f0] sm:$0xff] %v2026
  %2097 = vst [vmem:[%s7 + $0x1f8] sm:$0xff] %v2031
  // Predicated region
  $region41: #{gru_model_forward.1} parent=0 // pred_check
    _
  $region42: #{gru_model_forward.1} parent=0 // pred_check_branch
    %2099 = sbr.rel (0) target = $region44
  $region43: #{gru_model_forward.1} parent=0 // pred_region
    _
  $region44: #{gru_model_forward.1} parent=0 // pred_fallthru
    _
  // Predicated region
  $region45: #{gru_model_forward.1} parent=0 // pred_check
    _
  $region46: #{gru_model_forward.1} parent=0 // pred_check_branch
    %2101 = sbr.rel (0) target = $region48
  $region47: #{gru_model_forward.1} parent=0 // pred_region
    _
  $region48: #{gru_model_forward.1} parent=0 // pred_fallthru
    _

</llo_original>
